<compile_context>
chip_gen: v5e
topology: v5e:2x2
jax: 0.10.0
libtpu: 0.0.40
codegen_flags: <defaults>
</compile_context>

<pallas_src>
import jax
import jax.numpy as jnp
import numpy as np
from jax import lax
from jax.experimental import pallas as pl
from jax.experimental.pallas import tpu as pltpu

MAX_LENGTH = 10
SOS_token = 0


def decoder_kernel(m_ref, whh_ref, bhh_ref, wout_ref, bout_ref, h0_ref,
                   logp_ref, hout_ref):
    B, H = h0_ref.shape
    V = m_ref.shape[0]

    # Packed / fused weights (small after packing: ~16 padded vregs total).
    M = m_ref[...]          # [V, 3H] = relu(E) @ W_ih_all + b_ih   (fused)
    Whh = whh_ref[...]      # [H, 3H]
    bhh = bhh_ref[...]      # [1, 3H]
    Wout = wout_ref[...]    # [H, V]
    bout = bout_ref[...]    # [1, V]

    col_ids = lax.broadcasted_iota(jnp.int32, (B, V), 1)

    # Initial decoder input: SOS token for every batch element (one-hot).
    onehot = (col_ids == SOS_token).astype(jnp.float32)
    h = h0_ref[...]

    # Fully unrolled greedy decode (static trip count MAX_LENGTH = 10).
    for i in range(MAX_LENGTH):
        # Fused embedding lookup + ReLU + input-gate projection (+ b_ih):
        # one matmul per step.
        gx = jnp.dot(onehot, M, preferred_element_type=jnp.float32)
        # Hidden-state projection for all three gates: one matmul per step.
        gh = jnp.dot(h, Whh, preferred_element_type=jnp.float32) + bhh
        # GRU cell (PyTorch gate ordering r, z, n).
        r = jax.nn.sigmoid(gx[:, 0:H] + gh[:, 0:H])
        z = jax.nn.sigmoid(gx[:, H:2 * H] + gh[:, H:2 * H])
        n = jnp.tanh(gx[:, 2 * H:3 * H] + r * gh[:, 2 * H:3 * H])
        h = (1.0 - z) * n + z * h
        # Output projection.
        logits = jnp.dot(h, Wout, preferred_element_type=jnp.float32) + bout
        # log_softmax over vocab (max-stabilized).
        mx = jnp.max(logits, axis=-1, keepdims=True)
        lse = mx + jnp.log(jnp.sum(jnp.exp(logits - mx), axis=-1,
                                   keepdims=True))
        logp_ref[:, i, :] = logits - lse          # static index: [B, T, V]
        # Greedy argmax (lowest index on ties, matching torch.topk(1)).
        idx = jnp.min(jnp.where(logits >= mx, col_ids, V), axis=-1,
                      keepdims=True)
        onehot = (col_ids == idx).astype(jnp.float32)

    hout_ref[...] = h


def init_params(key, hidden_size, output_size):
    ks = jax.random.split(key, 8)
    s = 1.0 / np.sqrt(hidden_size)
    p = {
        "embedding": jax.random.normal(ks[0], (output_size, hidden_size),
                                       jnp.float32),
        "w_ih": jax.random.uniform(ks[1], (3 * hidden_size, hidden_size),
                                   jnp.float32, -s, s),
        "w_hh": jax.random.uniform(ks[2], (3 * hidden_size, hidden_size),
                                   jnp.float32, -s, s),
        "b_ih": jax.random.uniform(ks[3], (3 * hidden_size,), jnp.float32,
                                   -s, s),
        "b_hh": jax.random.uniform(ks[4], (3 * hidden_size,), jnp.float32,
                                   -s, s),
        "w_out": jax.random.uniform(ks[5], (output_size, hidden_size),
                                    jnp.float32, -s, s),
        "b_out": jax.random.uniform(ks[6], (output_size,), jnp.float32, -s, s),
    }
    return p


def decoder_rnn_forward(params, encoder_outputs, encoder_hidden):
    """Mirrors DecoderRNN.forward with target_tensor=None (greedy decode)."""
    B = encoder_outputs.shape[0]
    V, H = params["embedding"].shape

    # Pack the three GRU gate weights: [H, 3H], gate order (r|z|n) on lanes.
    W_ih_all = params["w_ih"].T                # [H, 3H]
    W_hh_all = params["w_hh"].T                # [H, 3H]
    b_ih = params["b_ih"].reshape(1, 3 * H)
    b_hh = params["b_hh"].reshape(1, 3 * H)

    # Fuse embedding lookup + ReLU + input-gate matmul + input bias:
    # onehot @ (relu(E) @ W_ih_all + 1*b_ih) == relu(E[id]) @ W_ih_all + b_ih.
    M = jnp.maximum(params["embedding"], 0.0) @ W_ih_all + b_ih   # [V, 3H]

    Wout = params["w_out"].T                   # [H, V]
    bout = params["b_out"].reshape(1, V)
    h0 = encoder_hidden.reshape(B, H)          # drop num_layers=1 axis

    args = (M, W_hh_all, b_hh, Wout, bout, h0)
    vm = pl.BlockSpec(memory_space=pltpu.MemorySpace.VMEM)
    decoder_outputs, h_final = pl.pallas_call(
        decoder_kernel,
        out_shape=(jax.ShapeDtypeStruct((B, MAX_LENGTH, V), jnp.float32),
                   jax.ShapeDtypeStruct((B, H), jnp.float32)),
        in_specs=[vm] * len(args),
        out_specs=(vm, vm),
    )(*args)

    decoder_hidden = h_final[None]             # [1, B, H]
    return decoder_outputs, decoder_hidden, None


def reference_forward(params, encoder_outputs, encoder_hidden):
    """Pure-JAX reference mirroring the PyTorch forward (greedy decode)."""
    B = encoder_outputs.shape[0]
    V, H = params["embedding"].shape
    w_ih, w_hh = params["w_ih"], params["w_hh"]
    b_ih, b_hh = params["b_ih"], params["b_hh"]
    h = encoder_hidden.reshape(B, H)
    ids = jnp.zeros((B,), jnp.int32)
    outs = []
    for _ in range(MAX_LENGTH):
        x = jax.nn.relu(params["embedding"][ids])
        gx = x @ w_ih.T + b_ih
        gh = h @ w_hh.T + b_hh
        r = jax.nn.sigmoid(gx[:, :H] + gh[:, :H])
        z = jax.nn.sigmoid(gx[:, H:2 * H] + gh[:, H:2 * H])
        n = jnp.tanh(gx[:, 2 * H:] + r * gh[:, 2 * H:])
        h = (1 - z) * n + z * h
        logits = h @ params["w_out"].T + params["b_out"]
        outs.append(logits)
        ids = jnp.argmax(logits, axis=-1).astype(jnp.int32)
    out = jnp.stack(outs, axis=1)
    return jax.nn.log_softmax(out, axis=-1), h[None], None


if __name__ == "__main__":
    B, H, V, S_ENC = 4, 32, 64, 8

    key = jax.random.PRNGKey(0)
    kp, ke, kh = jax.random.split(key, 3)
    params = init_params(kp, H, V)
    encoder_outputs = jax.random.normal(ke, (B, S_ENC, H), jnp.float32)
    encoder_hidden = jax.random.normal(kh, (1, B, H), jnp.float32)

    logp, hidden, _ = decoder_rnn_forward(params, encoder_outputs,
                                          encoder_hidden)
    jax.block_until_ready((logp, hidden))

    ref_logp, ref_hidden, _ = reference_forward(params, encoder_outputs,
                                                encoder_hidden)
    assert logp.shape == (B, MAX_LENGTH, V)
    assert hidden.shape == (1, B, H)
    np.testing.assert_allclose(np.asarray(logp), np.asarray(ref_logp),
                               rtol=1e-4, atol=1e-4)
    np.testing.assert_allclose(np.asarray(hidden), np.asarray(ref_hidden),
                               rtol=1e-4, atol=1e-4)
    print("KERNEL_OK")
</pallas_src>

<mosaic_0001>
module attributes {stable_mosaic.version = 11 : i64} {
  func.func @decoder_kernel(%arg0: memref<64x96xf32, #tpu.memory_space<vmem>>, %arg1: memref<32x96xf32, #tpu.memory_space<vmem>>, %arg2: memref<1x96xf32, #tpu.memory_space<vmem>>, %arg3: memref<32x64xf32, #tpu.memory_space<vmem>>, %arg4: memref<1x64xf32, #tpu.memory_space<vmem>>, %arg5: memref<4x32xf32, #tpu.memory_space<vmem>>, %arg6: memref<4x10x64xf32, #tpu.memory_space<vmem>>, %arg7: memref<4x32xf32, #tpu.memory_space<vmem>>) attributes {dimension_semantics = [], scalar_prefetch = 0 : i64, scratch_operands = 0 : i64, tpu.core_type = #tpu.core_type<tc>} {
    %c0 = arith.constant 0 : index
    %c0_0 = arith.constant 0 : index
    %0 = vector.load %arg0[%c0, %c0_0] : memref<64x96xf32, #tpu.memory_space<vmem>>, vector<64x96xf32>
    %c0_1 = arith.constant 0 : index
    %c0_2 = arith.constant 0 : index
    %1 = vector.load %arg1[%c0_1, %c0_2] : memref<32x96xf32, #tpu.memory_space<vmem>>, vector<32x96xf32>
    %c0_3 = arith.constant 0 : index
    %c0_4 = arith.constant 0 : index
    %2 = vector.load %arg2[%c0_3, %c0_4] : memref<1x96xf32, #tpu.memory_space<vmem>>, vector<1x96xf32>
    %c0_5 = arith.constant 0 : index
    %c0_6 = arith.constant 0 : index
    %3 = vector.load %arg3[%c0_5, %c0_6] : memref<32x64xf32, #tpu.memory_space<vmem>>, vector<32x64xf32>
    %c0_7 = arith.constant 0 : index
    %c0_8 = arith.constant 0 : index
    %4 = vector.load %arg4[%c0_7, %c0_8] : memref<1x64xf32, #tpu.memory_space<vmem>>, vector<1x64xf32>
    %5 = tpu.iota {dimensions = array<i32: 1>} : vector<4x64xi32>
    %c0_i32 = arith.constant 0 : i32
    %6 = vector.broadcast %c0_i32 : i32 to vector<4x64xi32>
    %7 = arith.cmpi eq, %5, %6 : vector<4x64xi32>
    %8 = arith.extui %7 : vector<4x64xi1> to vector<4x64xi32>
    %9 = arith.sitofp %8 : vector<4x64xi32> to vector<4x64xf32>
    %c0_9 = arith.constant 0 : index
    %c0_10 = arith.constant 0 : index
    %10 = vector.load %arg5[%c0_9, %c0_10] : memref<4x32xf32, #tpu.memory_space<vmem>>, vector<4x32xf32>
    %cst = arith.constant dense<0.000000e+00> : vector<4x96xf32>
    %11 = tpu.matmul %9, %0, %cst {dimension_numbers = #tpu.dot_dimension_numbers<[1], [0], [0], [1], [0, 0, 1, 1], [], []>} : vector<4x64xf32>, vector<64x96xf32>, vector<4x96xf32> -> vector<4x96xf32>
    %cst_11 = arith.constant dense<0.000000e+00> : vector<4x96xf32>
    %12 = tpu.matmul %10, %1, %cst_11 {dimension_numbers = #tpu.dot_dimension_numbers<[1], [0], [0], [1], [0, 0, 1, 1], [], []>} : vector<4x32xf32>, vector<32x96xf32>, vector<4x96xf32> -> vector<4x96xf32>
    %13 = vector.broadcast %2 : vector<1x96xf32> to vector<4x96xf32>
    %14 = arith.addf %12, %13 : vector<4x96xf32>
    %15 = vector.extract_strided_slice %11 {offsets = [0, 0], sizes = [4, 32], strides = [1, 1]} : vector<4x96xf32> to vector<4x32xf32>
    %16 = vector.extract_strided_slice %14 {offsets = [0, 0], sizes = [4, 32], strides = [1, 1]} : vector<4x96xf32> to vector<4x32xf32>
    %17 = arith.addf %15, %16 : vector<4x32xf32>
    %18 = arith.negf %17 : vector<4x32xf32>
    %19 = math.exp %18 : vector<4x32xf32>
    %cst_12 = arith.constant 1.000000e+00 : f32
    %20 = vector.broadcast %cst_12 : f32 to vector<4x32xf32>
    %21 = arith.addf %20, %19 : vector<4x32xf32>
    %22 = arith.divf %20, %21 : vector<4x32xf32>
    %23 = vector.extract_strided_slice %11 {offsets = [0, 32], sizes = [4, 32], strides = [1, 1]} : vector<4x96xf32> to vector<4x32xf32>
    %24 = vector.extract_strided_slice %14 {offsets = [0, 32], sizes = [4, 32], strides = [1, 1]} : vector<4x96xf32> to vector<4x32xf32>
    %25 = arith.addf %23, %24 : vector<4x32xf32>
    %26 = arith.negf %25 : vector<4x32xf32>
    %27 = math.exp %26 : vector<4x32xf32>
    %cst_13 = arith.constant 1.000000e+00 : f32
    %28 = vector.broadcast %cst_13 : f32 to vector<4x32xf32>
    %29 = arith.addf %28, %27 : vector<4x32xf32>
    %30 = arith.divf %28, %29 : vector<4x32xf32>
    %31 = vector.extract_strided_slice %11 {offsets = [0, 64], sizes = [4, 32], strides = [1, 1]} : vector<4x96xf32> to vector<4x32xf32>
    %32 = vector.extract_strided_slice %14 {offsets = [0, 64], sizes = [4, 32], strides = [1, 1]} : vector<4x96xf32> to vector<4x32xf32>
    %33 = arith.mulf %22, %32 : vector<4x32xf32>
    %34 = arith.addf %31, %33 : vector<4x32xf32>
    %35 = math.tanh %34 : vector<4x32xf32>
    %cst_14 = arith.constant 1.000000e+00 : f32
    %36 = vector.broadcast %cst_14 : f32 to vector<4x32xf32>
    %37 = arith.subf %36, %30 : vector<4x32xf32>
    %38 = arith.mulf %37, %35 : vector<4x32xf32>
    %39 = arith.mulf %30, %10 : vector<4x32xf32>
    %40 = arith.addf %38, %39 : vector<4x32xf32>
    %cst_15 = arith.constant dense<0.000000e+00> : vector<4x64xf32>
    %41 = tpu.matmul %40, %3, %cst_15 {dimension_numbers = #tpu.dot_dimension_numbers<[1], [0], [0], [1], [0, 0, 1, 1], [], []>} : vector<4x32xf32>, vector<32x64xf32>, vector<4x64xf32> -> vector<4x64xf32>
    %42 = vector.broadcast %4 : vector<1x64xf32> to vector<4x64xf32>
    %43 = arith.addf %41, %42 : vector<4x64xf32>
    %cst_16 = arith.constant dense<0xFF800000> : vector<4xf32>
    %44 = vector.multi_reduction <maximumf>, %43, %cst_16 [1] : vector<4x64xf32> to vector<4xf32>
    %45 = vector.shape_cast %44 : vector<4xf32> to vector<4x1xf32>
    %46 = vector.broadcast %45 : vector<4x1xf32> to vector<4x64xf32>
    %47 = arith.subf %43, %46 : vector<4x64xf32>
    %48 = math.exp %47 : vector<4x64xf32>
    %cst_17 = arith.constant dense<0.000000e+00> : vector<4xf32>
    %49 = vector.multi_reduction <add>, %48, %cst_17 [1] : vector<4x64xf32> to vector<4xf32>
    %50 = vector.shape_cast %49 : vector<4xf32> to vector<4x1xf32>
    %51 = math.log %50 : vector<4x1xf32>
    %52 = arith.addf %45, %51 : vector<4x1xf32>
    %53 = vector.broadcast %52 : vector<4x1xf32> to vector<4x64xf32>
    %54 = arith.subf %43, %53 : vector<4x64xf32>
    %c0_18 = arith.constant 0 : index
    %c0_19 = arith.constant 0 : index
    %c0_20 = arith.constant 0 : index
    %55 = vector.load %arg6[%c0_18, %c0_19, %c0_20] : memref<4x10x64xf32, #tpu.memory_space<vmem>>, vector<4x1x64xf32>
    %56 = vector.shape_cast %55 : vector<4x1x64xf32> to vector<4x64xf32>
    %57 = vector.shape_cast %54 : vector<4x64xf32> to vector<4x1x64xf32>
    tpu.vector_store %arg6[%c0_18, %c0_19, %c0_20], %57 {strides = array<i32>} : memref<4x10x64xf32, #tpu.memory_space<vmem>>, vector<4x1x64xf32>,
    %58 = vector.broadcast %45 : vector<4x1xf32> to vector<4x64xf32>
    %59 = arith.cmpf oge, %43, %58 : vector<4x64xf32>
    %c64_i32 = arith.constant 64 : i32
    %60 = vector.broadcast %c64_i32 : i32 to vector<4x64xi32>
    %61 = arith.select %59, %5, %60 : vector<4x64xi1>, vector<4x64xi32>
    %cst_21 = arith.constant dense<2147483647> : vector<4xi32>
    %62 = vector.multi_reduction <minsi>, %61, %cst_21 [1] : vector<4x64xi32> to vector<4xi32>
    %63 = vector.shape_cast %62 : vector<4xi32> to vector<4x1xi32>
    %64 = vector.broadcast %63 : vector<4x1xi32> to vector<4x64xi32>
    %65 = arith.cmpi eq, %5, %64 : vector<4x64xi32>
    %66 = arith.extui %65 : vector<4x64xi1> to vector<4x64xi32>
    %67 = arith.sitofp %66 : vector<4x64xi32> to vector<4x64xf32>
    %cst_22 = arith.constant dense<0.000000e+00> : vector<4x96xf32>
    %68 = tpu.matmul %67, %0, %cst_22 {dimension_numbers = #tpu.dot_dimension_numbers<[1], [0], [0], [1], [0, 0, 1, 1], [], []>} : vector<4x64xf32>, vector<64x96xf32>, vector<4x96xf32> -> vector<4x96xf32>
    %cst_23 = arith.constant dense<0.000000e+00> : vector<4x96xf32>
    %69 = tpu.matmul %40, %1, %cst_23 {dimension_numbers = #tpu.dot_dimension_numbers<[1], [0], [0], [1], [0, 0, 1, 1], [], []>} : vector<4x32xf32>, vector<32x96xf32>, vector<4x96xf32> -> vector<4x96xf32>
    %70 = vector.broadcast %2 : vector<1x96xf32> to vector<4x96xf32>
    %71 = arith.addf %69, %70 : vector<4x96xf32>
    %72 = vector.extract_strided_slice %68 {offsets = [0, 0], sizes = [4, 32], strides = [1, 1]} : vector<4x96xf32> to vector<4x32xf32>
    %73 = vector.extract_strided_slice %71 {offsets = [0, 0], sizes = [4, 32], strides = [1, 1]} : vector<4x96xf32> to vector<4x32xf32>
    %74 = arith.addf %72, %73 : vector<4x32xf32>
    %75 = arith.negf %74 : vector<4x32xf32>
    %76 = math.exp %75 : vector<4x32xf32>
    %cst_24 = arith.constant 1.000000e+00 : f32
    %77 = vector.broadcast %cst_24 : f32 to vector<4x32xf32>
    %78 = arith.addf %77, %76 : vector<4x32xf32>
    %79 = arith.divf %77, %78 : vector<4x32xf32>
    %80 = vector.extract_strided_slice %68 {offsets = [0, 32], sizes = [4, 32], strides = [1, 1]} : vector<4x96xf32> to vector<4x32xf32>
    %81 = vector.extract_strided_slice %71 {offsets = [0, 32], sizes = [4, 32], strides = [1, 1]} : vector<4x96xf32> to vector<4x32xf32>
    %82 = arith.addf %80, %81 : vector<4x32xf32>
    %83 = arith.negf %82 : vector<4x32xf32>
    %84 = math.exp %83 : vector<4x32xf32>
    %cst_25 = arith.constant 1.000000e+00 : f32
    %85 = vector.broadcast %cst_25 : f32 to vector<4x32xf32>
    %86 = arith.addf %85, %84 : vector<4x32xf32>
    %87 = arith.divf %85, %86 : vector<4x32xf32>
    %88 = vector.extract_strided_slice %68 {offsets = [0, 64], sizes = [4, 32], strides = [1, 1]} : vector<4x96xf32> to vector<4x32xf32>
    %89 = vector.extract_strided_slice %71 {offsets = [0, 64], sizes = [4, 32], strides = [1, 1]} : vector<4x96xf32> to vector<4x32xf32>
    %90 = arith.mulf %79, %89 : vector<4x32xf32>
    %91 = arith.addf %88, %90 : vector<4x32xf32>
    %92 = math.tanh %91 : vector<4x32xf32>
    %cst_26 = arith.constant 1.000000e+00 : f32
    %93 = vector.broadcast %cst_26 : f32 to vector<4x32xf32>
    %94 = arith.subf %93, %87 : vector<4x32xf32>
    %95 = arith.mulf %94, %92 : vector<4x32xf32>
    %96 = arith.mulf %87, %40 : vector<4x32xf32>
    %97 = arith.addf %95, %96 : vector<4x32xf32>
    %cst_27 = arith.constant dense<0.000000e+00> : vector<4x64xf32>
    %98 = tpu.matmul %97, %3, %cst_27 {dimension_numbers = #tpu.dot_dimension_numbers<[1], [0], [0], [1], [0, 0, 1, 1], [], []>} : vector<4x32xf32>, vector<32x64xf32>, vector<4x64xf32> -> vector<4x64xf32>
    %99 = vector.broadcast %4 : vector<1x64xf32> to vector<4x64xf32>
    %100 = arith.addf %98, %99 : vector<4x64xf32>
    %cst_28 = arith.constant dense<0xFF800000> : vector<4xf32>
    %101 = vector.multi_reduction <maximumf>, %100, %cst_28 [1] : vector<4x64xf32> to vector<4xf32>
    %102 = vector.shape_cast %101 : vector<4xf32> to vector<4x1xf32>
    %103 = vector.broadcast %102 : vector<4x1xf32> to vector<4x64xf32>
    %104 = arith.subf %100, %103 : vector<4x64xf32>
    %105 = math.exp %104 : vector<4x64xf32>
    %cst_29 = arith.constant dense<0.000000e+00> : vector<4xf32>
    %106 = vector.multi_reduction <add>, %105, %cst_29 [1] : vector<4x64xf32> to vector<4xf32>
    %107 = vector.shape_cast %106 : vector<4xf32> to vector<4x1xf32>
    %108 = math.log %107 : vector<4x1xf32>
    %109 = arith.addf %102, %108 : vector<4x1xf32>
    %110 = vector.broadcast %109 : vector<4x1xf32> to vector<4x64xf32>
    %111 = arith.subf %100, %110 : vector<4x64xf32>
    %c0_30 = arith.constant 0 : index
    %c1 = arith.constant 1 : index
    %c0_31 = arith.constant 0 : index
    %112 = vector.load %arg6[%c0_30, %c1, %c0_31] : memref<4x10x64xf32, #tpu.memory_space<vmem>>, vector<4x1x64xf32>
    %113 = vector.shape_cast %112 : vector<4x1x64xf32> to vector<4x64xf32>
    %114 = vector.shape_cast %111 : vector<4x64xf32> to vector<4x1x64xf32>
    tpu.vector_store %arg6[%c0_30, %c1, %c0_31], %114 {strides = array<i32>} : memref<4x10x64xf32, #tpu.memory_space<vmem>>, vector<4x1x64xf32>,
    %115 = vector.broadcast %102 : vector<4x1xf32> to vector<4x64xf32>
    %116 = arith.cmpf oge, %100, %115 : vector<4x64xf32>
    %c64_i32_32 = arith.constant 64 : i32
    %117 = vector.broadcast %c64_i32_32 : i32 to vector<4x64xi32>
    %118 = arith.select %116, %5, %117 : vector<4x64xi1>, vector<4x64xi32>
    %cst_33 = arith.constant dense<2147483647> : vector<4xi32>
    %119 = vector.multi_reduction <minsi>, %118, %cst_33 [1] : vector<4x64xi32> to vector<4xi32>
    %120 = vector.shape_cast %119 : vector<4xi32> to vector<4x1xi32>
    %121 = vector.broadcast %120 : vector<4x1xi32> to vector<4x64xi32>
    %122 = arith.cmpi eq, %5, %121 : vector<4x64xi32>
    %123 = arith.extui %122 : vector<4x64xi1> to vector<4x64xi32>
    %124 = arith.sitofp %123 : vector<4x64xi32> to vector<4x64xf32>
    %cst_34 = arith.constant dense<0.000000e+00> : vector<4x96xf32>
    %125 = tpu.matmul %124, %0, %cst_34 {dimension_numbers = #tpu.dot_dimension_numbers<[1], [0], [0], [1], [0, 0, 1, 1], [], []>} : vector<4x64xf32>, vector<64x96xf32>, vector<4x96xf32> -> vector<4x96xf32>
    %cst_35 = arith.constant dense<0.000000e+00> : vector<4x96xf32>
    %126 = tpu.matmul %97, %1, %cst_35 {dimension_numbers = #tpu.dot_dimension_numbers<[1], [0], [0], [1], [0, 0, 1, 1], [], []>} : vector<4x32xf32>, vector<32x96xf32>, vector<4x96xf32> -> vector<4x96xf32>
    %127 = vector.broadcast %2 : vector<1x96xf32> to vector<4x96xf32>
    %128 = arith.addf %126, %127 : vector<4x96xf32>
    %129 = vector.extract_strided_slice %125 {offsets = [0, 0], sizes = [4, 32], strides = [1, 1]} : vector<4x96xf32> to vector<4x32xf32>
    %130 = vector.extract_strided_slice %128 {offsets = [0, 0], sizes = [4, 32], strides = [1, 1]} : vector<4x96xf32> to vector<4x32xf32>
    %131 = arith.addf %129, %130 : vector<4x32xf32>
    %132 = arith.negf %131 : vector<4x32xf32>
    %133 = math.exp %132 : vector<4x32xf32>
    %cst_36 = arith.constant 1.000000e+00 : f32
    %134 = vector.broadcast %cst_36 : f32 to vector<4x32xf32>
    %135 = arith.addf %134, %133 : vector<4x32xf32>
    %136 = arith.divf %134, %135 : vector<4x32xf32>
    %137 = vector.extract_strided_slice %125 {offsets = [0, 32], sizes = [4, 32], strides = [1, 1]} : vector<4x96xf32> to vector<4x32xf32>
    %138 = vector.extract_strided_slice %128 {offsets = [0, 32], sizes = [4, 32], strides = [1, 1]} : vector<4x96xf32> to vector<4x32xf32>
    %139 = arith.addf %137, %138 : vector<4x32xf32>
    %140 = arith.negf %139 : vector<4x32xf32>
    %141 = math.exp %140 : vector<4x32xf32>
    %cst_37 = arith.constant 1.000000e+00 : f32
    %142 = vector.broadcast %cst_37 : f32 to vector<4x32xf32>
    %143 = arith.addf %142, %141 : vector<4x32xf32>
    %144 = arith.divf %142, %143 : vector<4x32xf32>
    %145 = vector.extract_strided_slice %125 {offsets = [0, 64], sizes = [4, 32], strides = [1, 1]} : vector<4x96xf32> to vector<4x32xf32>
    %146 = vector.extract_strided_slice %128 {offsets = [0, 64], sizes = [4, 32], strides = [1, 1]} : vector<4x96xf32> to vector<4x32xf32>
    %147 = arith.mulf %136, %146 : vector<4x32xf32>
    %148 = arith.addf %145, %147 : vector<4x32xf32>
    %149 = math.tanh %148 : vector<4x32xf32>
    %cst_38 = arith.constant 1.000000e+00 : f32
    %150 = vector.broadcast %cst_38 : f32 to vector<4x32xf32>
    %151 = arith.subf %150, %144 : vector<4x32xf32>
    %152 = arith.mulf %151, %149 : vector<4x32xf32>
    %153 = arith.mulf %144, %97 : vector<4x32xf32>
    %154 = arith.addf %152, %153 : vector<4x32xf32>
    %cst_39 = arith.constant dense<0.000000e+00> : vector<4x64xf32>
    %155 = tpu.matmul %154, %3, %cst_39 {dimension_numbers = #tpu.dot_dimension_numbers<[1], [0], [0], [1], [0, 0, 1, 1], [], []>} : vector<4x32xf32>, vector<32x64xf32>, vector<4x64xf32> -> vector<4x64xf32>
    %156 = vector.broadcast %4 : vector<1x64xf32> to vector<4x64xf32>
    %157 = arith.addf %155, %156 : vector<4x64xf32>
    %cst_40 = arith.constant dense<0xFF800000> : vector<4xf32>
    %158 = vector.multi_reduction <maximumf>, %157, %cst_40 [1] : vector<4x64xf32> to vector<4xf32>
    %159 = vector.shape_cast %158 : vector<4xf32> to vector<4x1xf32>
    %160 = vector.broadcast %159 : vector<4x1xf32> to vector<4x64xf32>
    %161 = arith.subf %157, %160 : vector<4x64xf32>
    %162 = math.exp %161 : vector<4x64xf32>
    %cst_41 = arith.constant dense<0.000000e+00> : vector<4xf32>
    %163 = vector.multi_reduction <add>, %162, %cst_41 [1] : vector<4x64xf32> to vector<4xf32>
    %164 = vector.shape_cast %163 : vector<4xf32> to vector<4x1xf32>
    %165 = math.log %164 : vector<4x1xf32>
    %166 = arith.addf %159, %165 : vector<4x1xf32>
    %167 = vector.broadcast %166 : vector<4x1xf32> to vector<4x64xf32>
    %168 = arith.subf %157, %167 : vector<4x64xf32>
    %c0_42 = arith.constant 0 : index
    %c2 = arith.constant 2 : index
    %c0_43 = arith.constant 0 : index
    %169 = vector.load %arg6[%c0_42, %c2, %c0_43] : memref<4x10x64xf32, #tpu.memory_space<vmem>>, vector<4x1x64xf32>
    %170 = vector.shape_cast %169 : vector<4x1x64xf32> to vector<4x64xf32>
    %171 = vector.shape_cast %168 : vector<4x64xf32> to vector<4x1x64xf32>
    tpu.vector_store %arg6[%c0_42, %c2, %c0_43], %171 {strides = array<i32>} : memref<4x10x64xf32, #tpu.memory_space<vmem>>, vector<4x1x64xf32>,
    %172 = vector.broadcast %159 : vector<4x1xf32> to vector<4x64xf32>
    %173 = arith.cmpf oge, %157, %172 : vector<4x64xf32>
    %c64_i32_44 = arith.constant 64 : i32
    %174 = vector.broadcast %c64_i32_44 : i32 to vector<4x64xi32>
    %175 = arith.select %173, %5, %174 : vector<4x64xi1>, vector<4x64xi32>
    %cst_45 = arith.constant dense<2147483647> : vector<4xi32>
    %176 = vector.multi_reduction <minsi>, %175, %cst_45 [1] : vector<4x64xi32> to vector<4xi32>
    %177 = vector.shape_cast %176 : vector<4xi32> to vector<4x1xi32>
    %178 = vector.broadcast %177 : vector<4x1xi32> to vector<4x64xi32>
    %179 = arith.cmpi eq, %5, %178 : vector<4x64xi32>
    %180 = arith.extui %179 : vector<4x64xi1> to vector<4x64xi32>
    %181 = arith.sitofp %180 : vector<4x64xi32> to vector<4x64xf32>
    %cst_46 = arith.constant dense<0.000000e+00> : vector<4x96xf32>
    %182 = tpu.matmul %181, %0, %cst_46 {dimension_numbers = #tpu.dot_dimension_numbers<[1], [0], [0], [1], [0, 0, 1, 1], [], []>} : vector<4x64xf32>, vector<64x96xf32>, vector<4x96xf32> -> vector<4x96xf32>
    %cst_47 = arith.constant dense<0.000000e+00> : vector<4x96xf32>
    %183 = tpu.matmul %154, %1, %cst_47 {dimension_numbers = #tpu.dot_dimension_numbers<[1], [0], [0], [1], [0, 0, 1, 1], [], []>} : vector<4x32xf32>, vector<32x96xf32>, vector<4x96xf32> -> vector<4x96xf32>
    %184 = vector.broadcast %2 : vector<1x96xf32> to vector<4x96xf32>
    %185 = arith.addf %183, %184 : vector<4x96xf32>
    %186 = vector.extract_strided_slice %182 {offsets = [0, 0], sizes = [4, 32], strides = [1, 1]} : vector<4x96xf32> to vector<4x32xf32>
    %187 = vector.extract_strided_slice %185 {offsets = [0, 0], sizes = [4, 32], strides = [1, 1]} : vector<4x96xf32> to vector<4x32xf32>
    %188 = arith.addf %186, %187 : vector<4x32xf32>
    %189 = arith.negf %188 : vector<4x32xf32>
    %190 = math.exp %189 : vector<4x32xf32>
    %cst_48 = arith.constant 1.000000e+00 : f32
    %191 = vector.broadcast %cst_48 : f32 to vector<4x32xf32>
    %192 = arith.addf %191, %190 : vector<4x32xf32>
    %193 = arith.divf %191, %192 : vector<4x32xf32>
    %194 = vector.extract_strided_slice %182 {offsets = [0, 32], sizes = [4, 32], strides = [1, 1]} : vector<4x96xf32> to vector<4x32xf32>
    %195 = vector.extract_strided_slice %185 {offsets = [0, 32], sizes = [4, 32], strides = [1, 1]} : vector<4x96xf32> to vector<4x32xf32>
    %196 = arith.addf %194, %195 : vector<4x32xf32>
    %197 = arith.negf %196 : vector<4x32xf32>
    %198 = math.exp %197 : vector<4x32xf32>
    %cst_49 = arith.constant 1.000000e+00 : f32
    %199 = vector.broadcast %cst_49 : f32 to vector<4x32xf32>
    %200 = arith.addf %199, %198 : vector<4x32xf32>
    %201 = arith.divf %199, %200 : vector<4x32xf32>
    %202 = vector.extract_strided_slice %182 {offsets = [0, 64], sizes = [4, 32], strides = [1, 1]} : vector<4x96xf32> to vector<4x32xf32>
    %203 = vector.extract_strided_slice %185 {offsets = [0, 64], sizes = [4, 32], strides = [1, 1]} : vector<4x96xf32> to vector<4x32xf32>
    %204 = arith.mulf %193, %203 : vector<4x32xf32>
    %205 = arith.addf %202, %204 : vector<4x32xf32>
    %206 = math.tanh %205 : vector<4x32xf32>
    %cst_50 = arith.constant 1.000000e+00 : f32
    %207 = vector.broadcast %cst_50 : f32 to vector<4x32xf32>
    %208 = arith.subf %207, %201 : vector<4x32xf32>
    %209 = arith.mulf %208, %206 : vector<4x32xf32>
    %210 = arith.mulf %201, %154 : vector<4x32xf32>
    %211 = arith.addf %209, %210 : vector<4x32xf32>
    %cst_51 = arith.constant dense<0.000000e+00> : vector<4x64xf32>
    %212 = tpu.matmul %211, %3, %cst_51 {dimension_numbers = #tpu.dot_dimension_numbers<[1], [0], [0], [1], [0, 0, 1, 1], [], []>} : vector<4x32xf32>, vector<32x64xf32>, vector<4x64xf32> -> vector<4x64xf32>
    %213 = vector.broadcast %4 : vector<1x64xf32> to vector<4x64xf32>
    %214 = arith.addf %212, %213 : vector<4x64xf32>
    %cst_52 = arith.constant dense<0xFF800000> : vector<4xf32>
    %215 = vector.multi_reduction <maximumf>, %214, %cst_52 [1] : vector<4x64xf32> to vector<4xf32>
    %216 = vector.shape_cast %215 : vector<4xf32> to vector<4x1xf32>
    %217 = vector.broadcast %216 : vector<4x1xf32> to vector<4x64xf32>
    %218 = arith.subf %214, %217 : vector<4x64xf32>
    %219 = math.exp %218 : vector<4x64xf32>
    %cst_53 = arith.constant dense<0.000000e+00> : vector<4xf32>
    %220 = vector.multi_reduction <add>, %219, %cst_53 [1] : vector<4x64xf32> to vector<4xf32>
    %221 = vector.shape_cast %220 : vector<4xf32> to vector<4x1xf32>
    %222 = math.log %221 : vector<4x1xf32>
    %223 = arith.addf %216, %222 : vector<4x1xf32>
    %224 = vector.broadcast %223 : vector<4x1xf32> to vector<4x64xf32>
    %225 = arith.subf %214, %224 : vector<4x64xf32>
    %c0_54 = arith.constant 0 : index
    %c3 = arith.constant 3 : index
    %c0_55 = arith.constant 0 : index
    %226 = vector.load %arg6[%c0_54, %c3, %c0_55] : memref<4x10x64xf32, #tpu.memory_space<vmem>>, vector<4x1x64xf32>
    %227 = vector.shape_cast %226 : vector<4x1x64xf32> to vector<4x64xf32>
    %228 = vector.shape_cast %225 : vector<4x64xf32> to vector<4x1x64xf32>
    tpu.vector_store %arg6[%c0_54, %c3, %c0_55], %228 {strides = array<i32>} : memref<4x10x64xf32, #tpu.memory_space<vmem>>, vector<4x1x64xf32>,
    %229 = vector.broadcast %216 : vector<4x1xf32> to vector<4x64xf32>
    %230 = arith.cmpf oge, %214, %229 : vector<4x64xf32>
    %c64_i32_56 = arith.constant 64 : i32
    %231 = vector.broadcast %c64_i32_56 : i32 to vector<4x64xi32>
    %232 = arith.select %230, %5, %231 : vector<4x64xi1>, vector<4x64xi32>
    %cst_57 = arith.constant dense<2147483647> : vector<4xi32>
    %233 = vector.multi_reduction <minsi>, %232, %cst_57 [1] : vector<4x64xi32> to vector<4xi32>
    %234 = vector.shape_cast %233 : vector<4xi32> to vector<4x1xi32>
    %235 = vector.broadcast %234 : vector<4x1xi32> to vector<4x64xi32>
    %236 = arith.cmpi eq, %5, %235 : vector<4x64xi32>
    %237 = arith.extui %236 : vector<4x64xi1> to vector<4x64xi32>
    %238 = arith.sitofp %237 : vector<4x64xi32> to vector<4x64xf32>
    %cst_58 = arith.constant dense<0.000000e+00> : vector<4x96xf32>
    %239 = tpu.matmul %238, %0, %cst_58 {dimension_numbers = #tpu.dot_dimension_numbers<[1], [0], [0], [1], [0, 0, 1, 1], [], []>} : vector<4x64xf32>, vector<64x96xf32>, vector<4x96xf32> -> vector<4x96xf32>
    %cst_59 = arith.constant dense<0.000000e+00> : vector<4x96xf32>
    %240 = tpu.matmul %211, %1, %cst_59 {dimension_numbers = #tpu.dot_dimension_numbers<[1], [0], [0], [1], [0, 0, 1, 1], [], []>} : vector<4x32xf32>, vector<32x96xf32>, vector<4x96xf32> -> vector<4x96xf32>
    %241 = vector.broadcast %2 : vector<1x96xf32> to vector<4x96xf32>
    %242 = arith.addf %240, %241 : vector<4x96xf32>
    %243 = vector.extract_strided_slice %239 {offsets = [0, 0], sizes = [4, 32], strides = [1, 1]} : vector<4x96xf32> to vector<4x32xf32>
    %244 = vector.extract_strided_slice %242 {offsets = [0, 0], sizes = [4, 32], strides = [1, 1]} : vector<4x96xf32> to vector<4x32xf32>
    %245 = arith.addf %243, %244 : vector<4x32xf32>
    %246 = arith.negf %245 : vector<4x32xf32>
    %247 = math.exp %246 : vector<4x32xf32>
    %cst_60 = arith.constant 1.000000e+00 : f32
    %248 = vector.broadcast %cst_60 : f32 to vector<4x32xf32>
    %249 = arith.addf %248, %247 : vector<4x32xf32>
    %250 = arith.divf %248, %249 : vector<4x32xf32>
    %251 = vector.extract_strided_slice %239 {offsets = [0, 32], sizes = [4, 32], strides = [1, 1]} : vector<4x96xf32> to vector<4x32xf32>
    %252 = vector.extract_strided_slice %242 {offsets = [0, 32], sizes = [4, 32], strides = [1, 1]} : vector<4x96xf32> to vector<4x32xf32>
    %253 = arith.addf %251, %252 : vector<4x32xf32>
    %254 = arith.negf %253 : vector<4x32xf32>
    %255 = math.exp %254 : vector<4x32xf32>
    %cst_61 = arith.constant 1.000000e+00 : f32
    %256 = vector.broadcast %cst_61 : f32 to vector<4x32xf32>
    %257 = arith.addf %256, %255 : vector<4x32xf32>
    %258 = arith.divf %256, %257 : vector<4x32xf32>
    %259 = vector.extract_strided_slice %239 {offsets = [0, 64], sizes = [4, 32], strides = [1, 1]} : vector<4x96xf32> to vector<4x32xf32>
    %260 = vector.extract_strided_slice %242 {offsets = [0, 64], sizes = [4, 32], strides = [1, 1]} : vector<4x96xf32> to vector<4x32xf32>
    %261 = arith.mulf %250, %260 : vector<4x32xf32>
    %262 = arith.addf %259, %261 : vector<4x32xf32>
    %263 = math.tanh %262 : vector<4x32xf32>
    %cst_62 = arith.constant 1.000000e+00 : f32
    %264 = vector.broadcast %cst_62 : f32 to vector<4x32xf32>
    %265 = arith.subf %264, %258 : vector<4x32xf32>
    %266 = arith.mulf %265, %263 : vector<4x32xf32>
    %267 = arith.mulf %258, %211 : vector<4x32xf32>
    %268 = arith.addf %266, %267 : vector<4x32xf32>
    %cst_63 = arith.constant dense<0.000000e+00> : vector<4x64xf32>
    %269 = tpu.matmul %268, %3, %cst_63 {dimension_numbers = #tpu.dot_dimension_numbers<[1], [0], [0], [1], [0, 0, 1, 1], [], []>} : vector<4x32xf32>, vector<32x64xf32>, vector<4x64xf32> -> vector<4x64xf32>
    %270 = vector.broadcast %4 : vector<1x64xf32> to vector<4x64xf32>
    %271 = arith.addf %269, %270 : vector<4x64xf32>
    %cst_64 = arith.constant dense<0xFF800000> : vector<4xf32>
    %272 = vector.multi_reduction <maximumf>, %271, %cst_64 [1] : vector<4x64xf32> to vector<4xf32>
    %273 = vector.shape_cast %272 : vector<4xf32> to vector<4x1xf32>
    %274 = vector.broadcast %273 : vector<4x1xf32> to vector<4x64xf32>
    %275 = arith.subf %271, %274 : vector<4x64xf32>
    %276 = math.exp %275 : vector<4x64xf32>
    %cst_65 = arith.constant dense<0.000000e+00> : vector<4xf32>
    %277 = vector.multi_reduction <add>, %276, %cst_65 [1] : vector<4x64xf32> to vector<4xf32>
    %278 = vector.shape_cast %277 : vector<4xf32> to vector<4x1xf32>
    %279 = math.log %278 : vector<4x1xf32>
    %280 = arith.addf %273, %279 : vector<4x1xf32>
    %281 = vector.broadcast %280 : vector<4x1xf32> to vector<4x64xf32>
    %282 = arith.subf %271, %281 : vector<4x64xf32>
    %c0_66 = arith.constant 0 : index
    %c4 = arith.constant 4 : index
    %c0_67 = arith.constant 0 : index
    %283 = vector.load %arg6[%c0_66, %c4, %c0_67] : memref<4x10x64xf32, #tpu.memory_space<vmem>>, vector<4x1x64xf32>
    %284 = vector.shape_cast %283 : vector<4x1x64xf32> to vector<4x64xf32>
    %285 = vector.shape_cast %282 : vector<4x64xf32> to vector<4x1x64xf32>
    tpu.vector_store %arg6[%c0_66, %c4, %c0_67], %285 {strides = array<i32>} : memref<4x10x64xf32, #tpu.memory_space<vmem>>, vector<4x1x64xf32>,
    %286 = vector.broadcast %273 : vector<4x1xf32> to vector<4x64xf32>
    %287 = arith.cmpf oge, %271, %286 : vector<4x64xf32>
    %c64_i32_68 = arith.constant 64 : i32
    %288 = vector.broadcast %c64_i32_68 : i32 to vector<4x64xi32>
    %289 = arith.select %287, %5, %288 : vector<4x64xi1>, vector<4x64xi32>
    %cst_69 = arith.constant dense<2147483647> : vector<4xi32>
    %290 = vector.multi_reduction <minsi>, %289, %cst_69 [1] : vector<4x64xi32> to vector<4xi32>
    %291 = vector.shape_cast %290 : vector<4xi32> to vector<4x1xi32>
    %292 = vector.broadcast %291 : vector<4x1xi32> to vector<4x64xi32>
    %293 = arith.cmpi eq, %5, %292 : vector<4x64xi32>
    %294 = arith.extui %293 : vector<4x64xi1> to vector<4x64xi32>
    %295 = arith.sitofp %294 : vector<4x64xi32> to vector<4x64xf32>
    %cst_70 = arith.constant dense<0.000000e+00> : vector<4x96xf32>
    %296 = tpu.matmul %295, %0, %cst_70 {dimension_numbers = #tpu.dot_dimension_numbers<[1], [0], [0], [1], [0, 0, 1, 1], [], []>} : vector<4x64xf32>, vector<64x96xf32>, vector<4x96xf32> -> vector<4x96xf32>
    %cst_71 = arith.constant dense<0.000000e+00> : vector<4x96xf32>
    %297 = tpu.matmul %268, %1, %cst_71 {dimension_numbers = #tpu.dot_dimension_numbers<[1], [0], [0], [1], [0, 0, 1, 1], [], []>} : vector<4x32xf32>, vector<32x96xf32>, vector<4x96xf32> -> vector<4x96xf32>
    %298 = vector.broadcast %2 : vector<1x96xf32> to vector<4x96xf32>
    %299 = arith.addf %297, %298 : vector<4x96xf32>
    %300 = vector.extract_strided_slice %296 {offsets = [0, 0], sizes = [4, 32], strides = [1, 1]} : vector<4x96xf32> to vector<4x32xf32>
    %301 = vector.extract_strided_slice %299 {offsets = [0, 0], sizes = [4, 32], strides = [1, 1]} : vector<4x96xf32> to vector<4x32xf32>
    %302 = arith.addf %300, %301 : vector<4x32xf32>
    %303 = arith.negf %302 : vector<4x32xf32>
    %304 = math.exp %303 : vector<4x32xf32>
    %cst_72 = arith.constant 1.000000e+00 : f32
    %305 = vector.broadcast %cst_72 : f32 to vector<4x32xf32>
    %306 = arith.addf %305, %304 : vector<4x32xf32>
    %307 = arith.divf %305, %306 : vector<4x32xf32>
    %308 = vector.extract_strided_slice %296 {offsets = [0, 32], sizes = [4, 32], strides = [1, 1]} : vector<4x96xf32> to vector<4x32xf32>
    %309 = vector.extract_strided_slice %299 {offsets = [0, 32], sizes = [4, 32], strides = [1, 1]} : vector<4x96xf32> to vector<4x32xf32>
    %310 = arith.addf %308, %309 : vector<4x32xf32>
    %311 = arith.negf %310 : vector<4x32xf32>
    %312 = math.exp %311 : vector<4x32xf32>
    %cst_73 = arith.constant 1.000000e+00 : f32
    %313 = vector.broadcast %cst_73 : f32 to vector<4x32xf32>
    %314 = arith.addf %313, %312 : vector<4x32xf32>
    %315 = arith.divf %313, %314 : vector<4x32xf32>
    %316 = vector.extract_strided_slice %296 {offsets = [0, 64], sizes = [4, 32], strides = [1, 1]} : vector<4x96xf32> to vector<4x32xf32>
    %317 = vector.extract_strided_slice %299 {offsets = [0, 64], sizes = [4, 32], strides = [1, 1]} : vector<4x96xf32> to vector<4x32xf32>
    %318 = arith.mulf %307, %317 : vector<4x32xf32>
    %319 = arith.addf %316, %318 : vector<4x32xf32>
    %320 = math.tanh %319 : vector<4x32xf32>
    %cst_74 = arith.constant 1.000000e+00 : f32
    %321 = vector.broadcast %cst_74 : f32 to vector<4x32xf32>
    %322 = arith.subf %321, %315 : vector<4x32xf32>
    %323 = arith.mulf %322, %320 : vector<4x32xf32>
    %324 = arith.mulf %315, %268 : vector<4x32xf32>
    %325 = arith.addf %323, %324 : vector<4x32xf32>
    %cst_75 = arith.constant dense<0.000000e+00> : vector<4x64xf32>
    %326 = tpu.matmul %325, %3, %cst_75 {dimension_numbers = #tpu.dot_dimension_numbers<[1], [0], [0], [1], [0, 0, 1, 1], [], []>} : vector<4x32xf32>, vector<32x64xf32>, vector<4x64xf32> -> vector<4x64xf32>
    %327 = vector.broadcast %4 : vector<1x64xf32> to vector<4x64xf32>
    %328 = arith.addf %326, %327 : vector<4x64xf32>
    %cst_76 = arith.constant dense<0xFF800000> : vector<4xf32>
    %329 = vector.multi_reduction <maximumf>, %328, %cst_76 [1] : vector<4x64xf32> to vector<4xf32>
    %330 = vector.shape_cast %329 : vector<4xf32> to vector<4x1xf32>
    %331 = vector.broadcast %330 : vector<4x1xf32> to vector<4x64xf32>
    %332 = arith.subf %328, %331 : vector<4x64xf32>
    %333 = math.exp %332 : vector<4x64xf32>
    %cst_77 = arith.constant dense<0.000000e+00> : vector<4xf32>
    %334 = vector.multi_reduction <add>, %333, %cst_77 [1] : vector<4x64xf32> to vector<4xf32>
    %335 = vector.shape_cast %334 : vector<4xf32> to vector<4x1xf32>
    %336 = math.log %335 : vector<4x1xf32>
    %337 = arith.addf %330, %336 : vector<4x1xf32>
    %338 = vector.broadcast %337 : vector<4x1xf32> to vector<4x64xf32>
    %339 = arith.subf %328, %338 : vector<4x64xf32>
    %c0_78 = arith.constant 0 : index
    %c5 = arith.constant 5 : index
    %c0_79 = arith.constant 0 : index
    %340 = vector.load %arg6[%c0_78, %c5, %c0_79] : memref<4x10x64xf32, #tpu.memory_space<vmem>>, vector<4x1x64xf32>
    %341 = vector.shape_cast %340 : vector<4x1x64xf32> to vector<4x64xf32>
    %342 = vector.shape_cast %339 : vector<4x64xf32> to vector<4x1x64xf32>
    tpu.vector_store %arg6[%c0_78, %c5, %c0_79], %342 {strides = array<i32>} : memref<4x10x64xf32, #tpu.memory_space<vmem>>, vector<4x1x64xf32>,
    %343 = vector.broadcast %330 : vector<4x1xf32> to vector<4x64xf32>
    %344 = arith.cmpf oge, %328, %343 : vector<4x64xf32>
    %c64_i32_80 = arith.constant 64 : i32
    %345 = vector.broadcast %c64_i32_80 : i32 to vector<4x64xi32>
    %346 = arith.select %344, %5, %345 : vector<4x64xi1>, vector<4x64xi32>
    %cst_81 = arith.constant dense<2147483647> : vector<4xi32>
    %347 = vector.multi_reduction <minsi>, %346, %cst_81 [1] : vector<4x64xi32> to vector<4xi32>
    %348 = vector.shape_cast %347 : vector<4xi32> to vector<4x1xi32>
    %349 = vector.broadcast %348 : vector<4x1xi32> to vector<4x64xi32>
    %350 = arith.cmpi eq, %5, %349 : vector<4x64xi32>
    %351 = arith.extui %350 : vector<4x64xi1> to vector<4x64xi32>
    %352 = arith.sitofp %351 : vector<4x64xi32> to vector<4x64xf32>
    %cst_82 = arith.constant dense<0.000000e+00> : vector<4x96xf32>
    %353 = tpu.matmul %352, %0, %cst_82 {dimension_numbers = #tpu.dot_dimension_numbers<[1], [0], [0], [1], [0, 0, 1, 1], [], []>} : vector<4x64xf32>, vector<64x96xf32>, vector<4x96xf32> -> vector<4x96xf32>
    %cst_83 = arith.constant dense<0.000000e+00> : vector<4x96xf32>
    %354 = tpu.matmul %325, %1, %cst_83 {dimension_numbers = #tpu.dot_dimension_numbers<[1], [0], [0], [1], [0, 0, 1, 1], [], []>} : vector<4x32xf32>, vector<32x96xf32>, vector<4x96xf32> -> vector<4x96xf32>
    %355 = vector.broadcast %2 : vector<1x96xf32> to vector<4x96xf32>
    %356 = arith.addf %354, %355 : vector<4x96xf32>
    %357 = vector.extract_strided_slice %353 {offsets = [0, 0], sizes = [4, 32], strides = [1, 1]} : vector<4x96xf32> to vector<4x32xf32>
    %358 = vector.extract_strided_slice %356 {offsets = [0, 0], sizes = [4, 32], strides = [1, 1]} : vector<4x96xf32> to vector<4x32xf32>
    %359 = arith.addf %357, %358 : vector<4x32xf32>
    %360 = arith.negf %359 : vector<4x32xf32>
    %361 = math.exp %360 : vector<4x32xf32>
    %cst_84 = arith.constant 1.000000e+00 : f32
    %362 = vector.broadcast %cst_84 : f32 to vector<4x32xf32>
    %363 = arith.addf %362, %361 : vector<4x32xf32>
    %364 = arith.divf %362, %363 : vector<4x32xf32>
    %365 = vector.extract_strided_slice %353 {offsets = [0, 32], sizes = [4, 32], strides = [1, 1]} : vector<4x96xf32> to vector<4x32xf32>
    %366 = vector.extract_strided_slice %356 {offsets = [0, 32], sizes = [4, 32], strides = [1, 1]} : vector<4x96xf32> to vector<4x32xf32>
    %367 = arith.addf %365, %366 : vector<4x32xf32>
    %368 = arith.negf %367 : vector<4x32xf32>
    %369 = math.exp %368 : vector<4x32xf32>
    %cst_85 = arith.constant 1.000000e+00 : f32
    %370 = vector.broadcast %cst_85 : f32 to vector<4x32xf32>
    %371 = arith.addf %370, %369 : vector<4x32xf32>
    %372 = arith.divf %370, %371 : vector<4x32xf32>
    %373 = vector.extract_strided_slice %353 {offsets = [0, 64], sizes = [4, 32], strides = [1, 1]} : vector<4x96xf32> to vector<4x32xf32>
    %374 = vector.extract_strided_slice %356 {offsets = [0, 64], sizes = [4, 32], strides = [1, 1]} : vector<4x96xf32> to vector<4x32xf32>
    %375 = arith.mulf %364, %374 : vector<4x32xf32>
    %376 = arith.addf %373, %375 : vector<4x32xf32>
    %377 = math.tanh %376 : vector<4x32xf32>
    %cst_86 = arith.constant 1.000000e+00 : f32
    %378 = vector.broadcast %cst_86 : f32 to vector<4x32xf32>
    %379 = arith.subf %378, %372 : vector<4x32xf32>
    %380 = arith.mulf %379, %377 : vector<4x32xf32>
    %381 = arith.mulf %372, %325 : vector<4x32xf32>
    %382 = arith.addf %380, %381 : vector<4x32xf32>
    %cst_87 = arith.constant dense<0.000000e+00> : vector<4x64xf32>
    %383 = tpu.matmul %382, %3, %cst_87 {dimension_numbers = #tpu.dot_dimension_numbers<[1], [0], [0], [1], [0, 0, 1, 1], [], []>} : vector<4x32xf32>, vector<32x64xf32>, vector<4x64xf32> -> vector<4x64xf32>
    %384 = vector.broadcast %4 : vector<1x64xf32> to vector<4x64xf32>
    %385 = arith.addf %383, %384 : vector<4x64xf32>
    %cst_88 = arith.constant dense<0xFF800000> : vector<4xf32>
    %386 = vector.multi_reduction <maximumf>, %385, %cst_88 [1] : vector<4x64xf32> to vector<4xf32>
    %387 = vector.shape_cast %386 : vector<4xf32> to vector<4x1xf32>
    %388 = vector.broadcast %387 : vector<4x1xf32> to vector<4x64xf32>
    %389 = arith.subf %385, %388 : vector<4x64xf32>
    %390 = math.exp %389 : vector<4x64xf32>
    %cst_89 = arith.constant dense<0.000000e+00> : vector<4xf32>
    %391 = vector.multi_reduction <add>, %390, %cst_89 [1] : vector<4x64xf32> to vector<4xf32>
    %392 = vector.shape_cast %391 : vector<4xf32> to vector<4x1xf32>
    %393 = math.log %392 : vector<4x1xf32>
    %394 = arith.addf %387, %393 : vector<4x1xf32>
    %395 = vector.broadcast %394 : vector<4x1xf32> to vector<4x64xf32>
    %396 = arith.subf %385, %395 : vector<4x64xf32>
    %c0_90 = arith.constant 0 : index
    %c6 = arith.constant 6 : index
    %c0_91 = arith.constant 0 : index
    %397 = vector.load %arg6[%c0_90, %c6, %c0_91] : memref<4x10x64xf32, #tpu.memory_space<vmem>>, vector<4x1x64xf32>
    %398 = vector.shape_cast %397 : vector<4x1x64xf32> to vector<4x64xf32>
    %399 = vector.shape_cast %396 : vector<4x64xf32> to vector<4x1x64xf32>
    tpu.vector_store %arg6[%c0_90, %c6, %c0_91], %399 {strides = array<i32>} : memref<4x10x64xf32, #tpu.memory_space<vmem>>, vector<4x1x64xf32>,
    %400 = vector.broadcast %387 : vector<4x1xf32> to vector<4x64xf32>
    %401 = arith.cmpf oge, %385, %400 : vector<4x64xf32>
    %c64_i32_92 = arith.constant 64 : i32
    %402 = vector.broadcast %c64_i32_92 : i32 to vector<4x64xi32>
    %403 = arith.select %401, %5, %402 : vector<4x64xi1>, vector<4x64xi32>
    %cst_93 = arith.constant dense<2147483647> : vector<4xi32>
    %404 = vector.multi_reduction <minsi>, %403, %cst_93 [1] : vector<4x64xi32> to vector<4xi32>
    %405 = vector.shape_cast %404 : vector<4xi32> to vector<4x1xi32>
    %406 = vector.broadcast %405 : vector<4x1xi32> to vector<4x64xi32>
    %407 = arith.cmpi eq, %5, %406 : vector<4x64xi32>
    %408 = arith.extui %407 : vector<4x64xi1> to vector<4x64xi32>
    %409 = arith.sitofp %408 : vector<4x64xi32> to vector<4x64xf32>
    %cst_94 = arith.constant dense<0.000000e+00> : vector<4x96xf32>
    %410 = tpu.matmul %409, %0, %cst_94 {dimension_numbers = #tpu.dot_dimension_numbers<[1], [0], [0], [1], [0, 0, 1, 1], [], []>} : vector<4x64xf32>, vector<64x96xf32>, vector<4x96xf32> -> vector<4x96xf32>
    %cst_95 = arith.constant dense<0.000000e+00> : vector<4x96xf32>
    %411 = tpu.matmul %382, %1, %cst_95 {dimension_numbers = #tpu.dot_dimension_numbers<[1], [0], [0], [1], [0, 0, 1, 1], [], []>} : vector<4x32xf32>, vector<32x96xf32>, vector<4x96xf32> -> vector<4x96xf32>
    %412 = vector.broadcast %2 : vector<1x96xf32> to vector<4x96xf32>
    %413 = arith.addf %411, %412 : vector<4x96xf32>
    %414 = vector.extract_strided_slice %410 {offsets = [0, 0], sizes = [4, 32], strides = [1, 1]} : vector<4x96xf32> to vector<4x32xf32>
    %415 = vector.extract_strided_slice %413 {offsets = [0, 0], sizes = [4, 32], strides = [1, 1]} : vector<4x96xf32> to vector<4x32xf32>
    %416 = arith.addf %414, %415 : vector<4x32xf32>
    %417 = arith.negf %416 : vector<4x32xf32>
    %418 = math.exp %417 : vector<4x32xf32>
    %cst_96 = arith.constant 1.000000e+00 : f32
    %419 = vector.broadcast %cst_96 : f32 to vector<4x32xf32>
    %420 = arith.addf %419, %418 : vector<4x32xf32>
    %421 = arith.divf %419, %420 : vector<4x32xf32>
    %422 = vector.extract_strided_slice %410 {offsets = [0, 32], sizes = [4, 32], strides = [1, 1]} : vector<4x96xf32> to vector<4x32xf32>
    %423 = vector.extract_strided_slice %413 {offsets = [0, 32], sizes = [4, 32], strides = [1, 1]} : vector<4x96xf32> to vector<4x32xf32>
    %424 = arith.addf %422, %423 : vector<4x32xf32>
    %425 = arith.negf %424 : vector<4x32xf32>
    %426 = math.exp %425 : vector<4x32xf32>
    %cst_97 = arith.constant 1.000000e+00 : f32
    %427 = vector.broadcast %cst_97 : f32 to vector<4x32xf32>
    %428 = arith.addf %427, %426 : vector<4x32xf32>
    %429 = arith.divf %427, %428 : vector<4x32xf32>
    %430 = vector.extract_strided_slice %410 {offsets = [0, 64], sizes = [4, 32], strides = [1, 1]} : vector<4x96xf32> to vector<4x32xf32>
    %431 = vector.extract_strided_slice %413 {offsets = [0, 64], sizes = [4, 32], strides = [1, 1]} : vector<4x96xf32> to vector<4x32xf32>
    %432 = arith.mulf %421, %431 : vector<4x32xf32>
    %433 = arith.addf %430, %432 : vector<4x32xf32>
    %434 = math.tanh %433 : vector<4x32xf32>
    %cst_98 = arith.constant 1.000000e+00 : f32
    %435 = vector.broadcast %cst_98 : f32 to vector<4x32xf32>
    %436 = arith.subf %435, %429 : vector<4x32xf32>
    %437 = arith.mulf %436, %434 : vector<4x32xf32>
    %438 = arith.mulf %429, %382 : vector<4x32xf32>
    %439 = arith.addf %437, %438 : vector<4x32xf32>
    %cst_99 = arith.constant dense<0.000000e+00> : vector<4x64xf32>
    %440 = tpu.matmul %439, %3, %cst_99 {dimension_numbers = #tpu.dot_dimension_numbers<[1], [0], [0], [1], [0, 0, 1, 1], [], []>} : vector<4x32xf32>, vector<32x64xf32>, vector<4x64xf32> -> vector<4x64xf32>
    %441 = vector.broadcast %4 : vector<1x64xf32> to vector<4x64xf32>
    %442 = arith.addf %440, %441 : vector<4x64xf32>
    %cst_100 = arith.constant dense<0xFF800000> : vector<4xf32>
    %443 = vector.multi_reduction <maximumf>, %442, %cst_100 [1] : vector<4x64xf32> to vector<4xf32>
    %444 = vector.shape_cast %443 : vector<4xf32> to vector<4x1xf32>
    %445 = vector.broadcast %444 : vector<4x1xf32> to vector<4x64xf32>
    %446 = arith.subf %442, %445 : vector<4x64xf32>
    %447 = math.exp %446 : vector<4x64xf32>
    %cst_101 = arith.constant dense<0.000000e+00> : vector<4xf32>
    %448 = vector.multi_reduction <add>, %447, %cst_101 [1] : vector<4x64xf32> to vector<4xf32>
    %449 = vector.shape_cast %448 : vector<4xf32> to vector<4x1xf32>
    %450 = math.log %449 : vector<4x1xf32>
    %451 = arith.addf %444, %450 : vector<4x1xf32>
    %452 = vector.broadcast %451 : vector<4x1xf32> to vector<4x64xf32>
    %453 = arith.subf %442, %452 : vector<4x64xf32>
    %c0_102 = arith.constant 0 : index
    %c7 = arith.constant 7 : index
    %c0_103 = arith.constant 0 : index
    %454 = vector.load %arg6[%c0_102, %c7, %c0_103] : memref<4x10x64xf32, #tpu.memory_space<vmem>>, vector<4x1x64xf32>
    %455 = vector.shape_cast %454 : vector<4x1x64xf32> to vector<4x64xf32>
    %456 = vector.shape_cast %453 : vector<4x64xf32> to vector<4x1x64xf32>
    tpu.vector_store %arg6[%c0_102, %c7, %c0_103], %456 {strides = array<i32>} : memref<4x10x64xf32, #tpu.memory_space<vmem>>, vector<4x1x64xf32>,
    %457 = vector.broadcast %444 : vector<4x1xf32> to vector<4x64xf32>
    %458 = arith.cmpf oge, %442, %457 : vector<4x64xf32>
    %c64_i32_104 = arith.constant 64 : i32
    %459 = vector.broadcast %c64_i32_104 : i32 to vector<4x64xi32>
    %460 = arith.select %458, %5, %459 : vector<4x64xi1>, vector<4x64xi32>
    %cst_105 = arith.constant dense<2147483647> : vector<4xi32>
    %461 = vector.multi_reduction <minsi>, %460, %cst_105 [1] : vector<4x64xi32> to vector<4xi32>
    %462 = vector.shape_cast %461 : vector<4xi32> to vector<4x1xi32>
    %463 = vector.broadcast %462 : vector<4x1xi32> to vector<4x64xi32>
    %464 = arith.cmpi eq, %5, %463 : vector<4x64xi32>
    %465 = arith.extui %464 : vector<4x64xi1> to vector<4x64xi32>
    %466 = arith.sitofp %465 : vector<4x64xi32> to vector<4x64xf32>
    %cst_106 = arith.constant dense<0.000000e+00> : vector<4x96xf32>
    %467 = tpu.matmul %466, %0, %cst_106 {dimension_numbers = #tpu.dot_dimension_numbers<[1], [0], [0], [1], [0, 0, 1, 1], [], []>} : vector<4x64xf32>, vector<64x96xf32>, vector<4x96xf32> -> vector<4x96xf32>
    %cst_107 = arith.constant dense<0.000000e+00> : vector<4x96xf32>
    %468 = tpu.matmul %439, %1, %cst_107 {dimension_numbers = #tpu.dot_dimension_numbers<[1], [0], [0], [1], [0, 0, 1, 1], [], []>} : vector<4x32xf32>, vector<32x96xf32>, vector<4x96xf32> -> vector<4x96xf32>
    %469 = vector.broadcast %2 : vector<1x96xf32> to vector<4x96xf32>
    %470 = arith.addf %468, %469 : vector<4x96xf32>
    %471 = vector.extract_strided_slice %467 {offsets = [0, 0], sizes = [4, 32], strides = [1, 1]} : vector<4x96xf32> to vector<4x32xf32>
    %472 = vector.extract_strided_slice %470 {offsets = [0, 0], sizes = [4, 32], strides = [1, 1]} : vector<4x96xf32> to vector<4x32xf32>
    %473 = arith.addf %471, %472 : vector<4x32xf32>
    %474 = arith.negf %473 : vector<4x32xf32>
    %475 = math.exp %474 : vector<4x32xf32>
    %cst_108 = arith.constant 1.000000e+00 : f32
    %476 = vector.broadcast %cst_108 : f32 to vector<4x32xf32>
    %477 = arith.addf %476, %475 : vector<4x32xf32>
    %478 = arith.divf %476, %477 : vector<4x32xf32>
    %479 = vector.extract_strided_slice %467 {offsets = [0, 32], sizes = [4, 32], strides = [1, 1]} : vector<4x96xf32> to vector<4x32xf32>
    %480 = vector.extract_strided_slice %470 {offsets = [0, 32], sizes = [4, 32], strides = [1, 1]} : vector<4x96xf32> to vector<4x32xf32>
    %481 = arith.addf %479, %480 : vector<4x32xf32>
    %482 = arith.negf %481 : vector<4x32xf32>
    %483 = math.exp %482 : vector<4x32xf32>
    %cst_109 = arith.constant 1.000000e+00 : f32
    %484 = vector.broadcast %cst_109 : f32 to vector<4x32xf32>
    %485 = arith.addf %484, %483 : vector<4x32xf32>
    %486 = arith.divf %484, %485 : vector<4x32xf32>
    %487 = vector.extract_strided_slice %467 {offsets = [0, 64], sizes = [4, 32], strides = [1, 1]} : vector<4x96xf32> to vector<4x32xf32>
    %488 = vector.extract_strided_slice %470 {offsets = [0, 64], sizes = [4, 32], strides = [1, 1]} : vector<4x96xf32> to vector<4x32xf32>
    %489 = arith.mulf %478, %488 : vector<4x32xf32>
    %490 = arith.addf %487, %489 : vector<4x32xf32>
    %491 = math.tanh %490 : vector<4x32xf32>
    %cst_110 = arith.constant 1.000000e+00 : f32
    %492 = vector.broadcast %cst_110 : f32 to vector<4x32xf32>
    %493 = arith.subf %492, %486 : vector<4x32xf32>
    %494 = arith.mulf %493, %491 : vector<4x32xf32>
    %495 = arith.mulf %486, %439 : vector<4x32xf32>
    %496 = arith.addf %494, %495 : vector<4x32xf32>
    %cst_111 = arith.constant dense<0.000000e+00> : vector<4x64xf32>
    %497 = tpu.matmul %496, %3, %cst_111 {dimension_numbers = #tpu.dot_dimension_numbers<[1], [0], [0], [1], [0, 0, 1, 1], [], []>} : vector<4x32xf32>, vector<32x64xf32>, vector<4x64xf32> -> vector<4x64xf32>
    %498 = vector.broadcast %4 : vector<1x64xf32> to vector<4x64xf32>
    %499 = arith.addf %497, %498 : vector<4x64xf32>
    %cst_112 = arith.constant dense<0xFF800000> : vector<4xf32>
    %500 = vector.multi_reduction <maximumf>, %499, %cst_112 [1] : vector<4x64xf32> to vector<4xf32>
    %501 = vector.shape_cast %500 : vector<4xf32> to vector<4x1xf32>
    %502 = vector.broadcast %501 : vector<4x1xf32> to vector<4x64xf32>
    %503 = arith.subf %499, %502 : vector<4x64xf32>
    %504 = math.exp %503 : vector<4x64xf32>
    %cst_113 = arith.constant dense<0.000000e+00> : vector<4xf32>
    %505 = vector.multi_reduction <add>, %504, %cst_113 [1] : vector<4x64xf32> to vector<4xf32>
    %506 = vector.shape_cast %505 : vector<4xf32> to vector<4x1xf32>
    %507 = math.log %506 : vector<4x1xf32>
    %508 = arith.addf %501, %507 : vector<4x1xf32>
    %509 = vector.broadcast %508 : vector<4x1xf32> to vector<4x64xf32>
    %510 = arith.subf %499, %509 : vector<4x64xf32>
    %c0_114 = arith.constant 0 : index
    %c8 = arith.constant 8 : index
    %c0_115 = arith.constant 0 : index
    %511 = vector.load %arg6[%c0_114, %c8, %c0_115] : memref<4x10x64xf32, #tpu.memory_space<vmem>>, vector<4x1x64xf32>
    %512 = vector.shape_cast %511 : vector<4x1x64xf32> to vector<4x64xf32>
    %513 = vector.shape_cast %510 : vector<4x64xf32> to vector<4x1x64xf32>
    tpu.vector_store %arg6[%c0_114, %c8, %c0_115], %513 {strides = array<i32>} : memref<4x10x64xf32, #tpu.memory_space<vmem>>, vector<4x1x64xf32>,
    %514 = vector.broadcast %501 : vector<4x1xf32> to vector<4x64xf32>
    %515 = arith.cmpf oge, %499, %514 : vector<4x64xf32>
    %c64_i32_116 = arith.constant 64 : i32
    %516 = vector.broadcast %c64_i32_116 : i32 to vector<4x64xi32>
    %517 = arith.select %515, %5, %516 : vector<4x64xi1>, vector<4x64xi32>
    %cst_117 = arith.constant dense<2147483647> : vector<4xi32>
    %518 = vector.multi_reduction <minsi>, %517, %cst_117 [1] : vector<4x64xi32> to vector<4xi32>
    %519 = vector.shape_cast %518 : vector<4xi32> to vector<4x1xi32>
    %520 = vector.broadcast %519 : vector<4x1xi32> to vector<4x64xi32>
    %521 = arith.cmpi eq, %5, %520 : vector<4x64xi32>
    %522 = arith.extui %521 : vector<4x64xi1> to vector<4x64xi32>
    %523 = arith.sitofp %522 : vector<4x64xi32> to vector<4x64xf32>
    %cst_118 = arith.constant dense<0.000000e+00> : vector<4x96xf32>
    %524 = tpu.matmul %523, %0, %cst_118 {dimension_numbers = #tpu.dot_dimension_numbers<[1], [0], [0], [1], [0, 0, 1, 1], [], []>} : vector<4x64xf32>, vector<64x96xf32>, vector<4x96xf32> -> vector<4x96xf32>
    %cst_119 = arith.constant dense<0.000000e+00> : vector<4x96xf32>
    %525 = tpu.matmul %496, %1, %cst_119 {dimension_numbers = #tpu.dot_dimension_numbers<[1], [0], [0], [1], [0, 0, 1, 1], [], []>} : vector<4x32xf32>, vector<32x96xf32>, vector<4x96xf32> -> vector<4x96xf32>
    %526 = vector.broadcast %2 : vector<1x96xf32> to vector<4x96xf32>
    %527 = arith.addf %525, %526 : vector<4x96xf32>
    %528 = vector.extract_strided_slice %524 {offsets = [0, 0], sizes = [4, 32], strides = [1, 1]} : vector<4x96xf32> to vector<4x32xf32>
    %529 = vector.extract_strided_slice %527 {offsets = [0, 0], sizes = [4, 32], strides = [1, 1]} : vector<4x96xf32> to vector<4x32xf32>
    %530 = arith.addf %528, %529 : vector<4x32xf32>
    %531 = arith.negf %530 : vector<4x32xf32>
    %532 = math.exp %531 : vector<4x32xf32>
    %cst_120 = arith.constant 1.000000e+00 : f32
    %533 = vector.broadcast %cst_120 : f32 to vector<4x32xf32>
    %534 = arith.addf %533, %532 : vector<4x32xf32>
    %535 = arith.divf %533, %534 : vector<4x32xf32>
    %536 = vector.extract_strided_slice %524 {offsets = [0, 32], sizes = [4, 32], strides = [1, 1]} : vector<4x96xf32> to vector<4x32xf32>
    %537 = vector.extract_strided_slice %527 {offsets = [0, 32], sizes = [4, 32], strides = [1, 1]} : vector<4x96xf32> to vector<4x32xf32>
    %538 = arith.addf %536, %537 : vector<4x32xf32>
    %539 = arith.negf %538 : vector<4x32xf32>
    %540 = math.exp %539 : vector<4x32xf32>
    %cst_121 = arith.constant 1.000000e+00 : f32
    %541 = vector.broadcast %cst_121 : f32 to vector<4x32xf32>
    %542 = arith.addf %541, %540 : vector<4x32xf32>
    %543 = arith.divf %541, %542 : vector<4x32xf32>
    %544 = vector.extract_strided_slice %524 {offsets = [0, 64], sizes = [4, 32], strides = [1, 1]} : vector<4x96xf32> to vector<4x32xf32>
    %545 = vector.extract_strided_slice %527 {offsets = [0, 64], sizes = [4, 32], strides = [1, 1]} : vector<4x96xf32> to vector<4x32xf32>
    %546 = arith.mulf %535, %545 : vector<4x32xf32>
    %547 = arith.addf %544, %546 : vector<4x32xf32>
    %548 = math.tanh %547 : vector<4x32xf32>
    %cst_122 = arith.constant 1.000000e+00 : f32
    %549 = vector.broadcast %cst_122 : f32 to vector<4x32xf32>
    %550 = arith.subf %549, %543 : vector<4x32xf32>
    %551 = arith.mulf %550, %548 : vector<4x32xf32>
    %552 = arith.mulf %543, %496 : vector<4x32xf32>
    %553 = arith.addf %551, %552 : vector<4x32xf32>
    %cst_123 = arith.constant dense<0.000000e+00> : vector<4x64xf32>
    %554 = tpu.matmul %553, %3, %cst_123 {dimension_numbers = #tpu.dot_dimension_numbers<[1], [0], [0], [1], [0, 0, 1, 1], [], []>} : vector<4x32xf32>, vector<32x64xf32>, vector<4x64xf32> -> vector<4x64xf32>
    %555 = vector.broadcast %4 : vector<1x64xf32> to vector<4x64xf32>
    %556 = arith.addf %554, %555 : vector<4x64xf32>
    %cst_124 = arith.constant dense<0xFF800000> : vector<4xf32>
    %557 = vector.multi_reduction <maximumf>, %556, %cst_124 [1] : vector<4x64xf32> to vector<4xf32>
    %558 = vector.shape_cast %557 : vector<4xf32> to vector<4x1xf32>
    %559 = vector.broadcast %558 : vector<4x1xf32> to vector<4x64xf32>
    %560 = arith.subf %556, %559 : vector<4x64xf32>
    %561 = math.exp %560 : vector<4x64xf32>
    %cst_125 = arith.constant dense<0.000000e+00> : vector<4xf32>
    %562 = vector.multi_reduction <add>, %561, %cst_125 [1] : vector<4x64xf32> to vector<4xf32>
    %563 = vector.shape_cast %562 : vector<4xf32> to vector<4x1xf32>
    %564 = math.log %563 : vector<4x1xf32>
    %565 = arith.addf %558, %564 : vector<4x1xf32>
    %566 = vector.broadcast %565 : vector<4x1xf32> to vector<4x64xf32>
    %567 = arith.subf %556, %566 : vector<4x64xf32>
    %c0_126 = arith.constant 0 : index
    %c9 = arith.constant 9 : index
    %c0_127 = arith.constant 0 : index
    %568 = vector.load %arg6[%c0_126, %c9, %c0_127] : memref<4x10x64xf32, #tpu.memory_space<vmem>>, vector<4x1x64xf32>
    %569 = vector.shape_cast %568 : vector<4x1x64xf32> to vector<4x64xf32>
    %570 = vector.shape_cast %567 : vector<4x64xf32> to vector<4x1x64xf32>
    tpu.vector_store %arg6[%c0_126, %c9, %c0_127], %570 {strides = array<i32>} : memref<4x10x64xf32, #tpu.memory_space<vmem>>, vector<4x1x64xf32>,
    %c0_128 = arith.constant 0 : index
    %c0_129 = arith.constant 0 : index
    %571 = vector.load %arg7[%c0_128, %c0_129] : memref<4x32xf32, #tpu.memory_space<vmem>>, vector<4x32xf32>
    tpu.vector_store %arg7[%c0_128, %c0_129], %553 {strides = array<i32>} : memref<4x32xf32, #tpu.memory_space<vmem>>, vector<4x32xf32>,
    return
  }
}

</mosaic_0001>

<llo_original>
// kernel: tpu_custom_call.1
$region0: #{tpu_custom_call.1}
  #allocation0 [shape = 'u32[]', space=smem, size = 0x4, offset = 0x4, fixed_abs, tag = 'smem constant byte address 0x4 - core index']
  #allocation1 [shape = 'u32[72,128]{1,0:T(1,128)}', space=vmem, size = 0x9000, scoped, tag = 'internal scratch']
  %s0 = inlined_call_operand.hbm [shape: f32[64,96], index: 0, kind: input, shape index: {}]
  %s1 = inlined_call_operand.hbm [shape: f32[32,96], index: 1, kind: input, shape index: {}]
  %s2 = inlined_call_operand.hbm [shape: f32[1,96], index: 2, kind: input, shape index: {}]
  %s3 = inlined_call_operand.hbm [shape: f32[32,64], index: 3, kind: input, shape index: {}]
  %s4 = inlined_call_operand.hbm [shape: f32[1,64], index: 4, kind: input, shape index: {}]
  %s5 = inlined_call_operand.vmem [shape: f32[4,32], index: 5, kind: input, shape index: {}]
  %s6 = inlined_call_operand.vmem [shape: f32[4,10,64], index: 6, kind: output, shape index: {0}]
  %s7 = inlined_call_operand.hbm [shape: f32[4,32], index: 7, kind: output, shape index: {1}]
  %8 = xla_tuple %s6, %s7
  %s9 = sld [smem:[#allocation0]]
  $region62: #{tpu_custom_call.1} parent=0
    _
  %s11 = ssub.s32 1, %s9
  %s12 = scalar_select 0, %s11, %s9
  $region1: #{tpu_custom_call.1} parent=0
    #allocation2 [shape = 'u8[32768]{0}', space=vmem, size = 0x8000, scoped, tag = 'input window, operand 0, single buffered']
    #allocation3 [shape = 's32[1]{0}', space=sflag, size = 0x4, scoped, tag = 'scoped memory for tpu_custom_call.1']
    #allocation4 [shape = 's32[1]{0}', space=sflag, size = 0x4, scoped, tag = 'scoped memory for tpu_custom_call.1']
    #allocation5 [shape = 'u8[16384]{0}', space=vmem, size = 0x4000, scoped, tag = 'input window, operand 1, single buffered']
    #allocation6 [shape = 's32[1]{0}', space=sflag, size = 0x4, scoped, tag = 'scoped memory for tpu_custom_call.1']
    #allocation7 [shape = 'u8[512]{0}', space=vmem, size = 0x400, scoped, tag = 'input window, operand 2, single buffered']
    #allocation8 [shape = 'u8[16384]{0}', space=vmem, size = 0x4000, scoped, tag = 'input window, operand 3, single buffered']
    #allocation9 [shape = 's32[1]{0}', space=sflag, size = 0x4, scoped, tag = 'scoped memory for tpu_custom_call.1']
    #allocation10 [shape = 'u8[512]{0}', space=vmem, size = 0x400, scoped, tag = 'input window, operand 4, single buffered']
    #allocation11 [shape = 'u8[2048]{0}', space=vmem, size = 0x800, scoped, tag = 'output window, operand 1, single buffered']
    %13 = vsyncpa [#allocation3], 0
    %14 = vsyncpa [#allocation6], 0
    %15 = vsyncpa [#allocation9], 0
    %16 = vsyncpa [#allocation4], 0
    // Predicated region
    $region2: #{tpu_custom_call.1} parent=1 // pred_check
      _
    $region3: #{tpu_custom_call.1} parent=1 // pred_check_branch
      %18 = sbr.rel (0) target = $region5
    $region4: #{tpu_custom_call.1} parent=1 // pred_region
      %20 = vsyncadd [#allocation3], 0
      %s21 = sshll.u32 %s0, 4
      %s22 = int_to_ptr.hbm [resolvable:$true] %s21
      %s23 = sshll.u32 [#allocation2], 4
      %s24 = int_to_ptr.vmem [resolvable:$true] %s23
      %29 = dma.hbm_to_vmem [thread:$0]  %s22, 1024, %s24, [#allocation3], 128, 128, 8
    $region5: #{tpu_custom_call.1} parent=1 // pred_fallthru
      _
    // Predicated region
    $region6: #{tpu_custom_call.1} parent=1 // pred_check
      _
    $region7: #{tpu_custom_call.1} parent=1 // pred_check_branch
      %31 = sbr.rel (0) target = $region9
    $region8: #{tpu_custom_call.1} parent=1 // pred_region
      %33 = vsyncadd [#allocation6], 0
      %s34 = sshll.u32 %s1, 4
      %s35 = int_to_ptr.hbm [resolvable:$true] %s34
      %s36 = sshll.u32 [#allocation5], 4
      %s37 = int_to_ptr.vmem [resolvable:$true] %s36
      %42 = dma.hbm_to_vmem [thread:$0]  %s35, 512, %s37, [#allocation6], 128, 128, 8
    $region9: #{tpu_custom_call.1} parent=1 // pred_fallthru
      _
    // Predicated region
    $region10: #{tpu_custom_call.1} parent=1 // pred_check
      _
    $region11: #{tpu_custom_call.1} parent=1 // pred_check_branch
      %44 = sbr.rel (0) target = $region13
    $region12: #{tpu_custom_call.1} parent=1 // pred_region
      %46 = vsyncadd [#allocation6], 0
      %s48 = sshll.u32 %s2, 4
      %s49 = int_to_ptr.hbm [resolvable:$true] %s48
      %s50 = sshll.u32 [#allocation7], 4
      %s51 = int_to_ptr.vmem [resolvable:$true] %s50
      %53 = dma.hbm_to_vmem [thread:$0]  %s49, 16, %s51, [#allocation6]
    $region13: #{tpu_custom_call.1} parent=1 // pred_fallthru
      _
    // Predicated region
    $region14: #{tpu_custom_call.1} parent=1 // pred_check
      _
    $region15: #{tpu_custom_call.1} parent=1 // pred_check_branch
      %55 = sbr.rel (0) target = $region17
    $region16: #{tpu_custom_call.1} parent=1 // pred_region
      %57 = vsyncadd [#allocation9], 0
      %s58 = sshll.u32 %s3, 4
      %s59 = int_to_ptr.hbm [resolvable:$true] %s58
      %s60 = sshll.u32 [#allocation8], 4
      %s61 = int_to_ptr.vmem [resolvable:$true] %s60
      %66 = dma.hbm_to_vmem [thread:$0]  %s59, 512, %s61, [#allocation9], 128, 128, 8
    $region17: #{tpu_custom_call.1} parent=1 // pred_fallthru
      _
    // Predicated region
    $region18: #{tpu_custom_call.1} parent=1 // pred_check
      _
    $region19: #{tpu_custom_call.1} parent=1 // pred_check_branch
      %68 = sbr.rel (0) target = $region21
    $region20: #{tpu_custom_call.1} parent=1 // pred_region
      %70 = vsyncadd [#allocation9], 0
      %s72 = sshll.u32 %s4, 4
      %s73 = int_to_ptr.hbm [resolvable:$true] %s72
      %s74 = sshll.u32 [#allocation10], 4
      %s75 = int_to_ptr.vmem [resolvable:$true] %s74
      %77 = dma.hbm_to_vmem [thread:$0]  %s73, 16, %s75, [#allocation9]
    $region21: #{tpu_custom_call.1} parent=1 // pred_fallthru
      _
    // Predicated region
    $region22: #{tpu_custom_call.1} parent=1 // pred_check
      _
    $region23: #{tpu_custom_call.1} parent=1 // pred_check_branch
      %79 = sbr.rel (0) target = $region25
    $region24: #{tpu_custom_call.1} parent=1 // pred_region
      _
    $region25: #{tpu_custom_call.1} parent=1 // pred_fallthru
      _
    // Predicated region
    $region26: #{tpu_custom_call.1} parent=1 // pred_check
      _
    $region27: #{tpu_custom_call.1} parent=1 // pred_check_branch
      %81 = sbr.rel (0) target = $region29
    $region28: #{tpu_custom_call.1} parent=1 // pred_region
      %83 = dma.done [#allocation3], 1024
    $region29: #{tpu_custom_call.1} parent=1 // pred_fallthru
      _
    // Predicated region
    $region30: #{tpu_custom_call.1} parent=1 // pred_check
      _
    $region31: #{tpu_custom_call.1} parent=1 // pred_check_branch
      %85 = sbr.rel (0) target = $region33
    $region32: #{tpu_custom_call.1} parent=1 // pred_region
      %87 = dma.done [#allocation6], 512
    $region33: #{tpu_custom_call.1} parent=1 // pred_fallthru
      _
    // Predicated region
    $region34: #{tpu_custom_call.1} parent=1 // pred_check
      _
    $region35: #{tpu_custom_call.1} parent=1 // pred_check_branch
      %89 = sbr.rel (0) target = $region37
    $region36: #{tpu_custom_call.1} parent=1 // pred_region
      %91 = dma.done [#allocation6], 16
    $region37: #{tpu_custom_call.1} parent=1 // pred_fallthru
      _
    // Predicated region
    $region38: #{tpu_custom_call.1} parent=1 // pred_check
      _
    $region39: #{tpu_custom_call.1} parent=1 // pred_check_branch
      %93 = sbr.rel (0) target = $region41
    $region40: #{tpu_custom_call.1} parent=1 // pred_region
      %95 = dma.done [#allocation9], 512
    $region41: #{tpu_custom_call.1} parent=1 // pred_fallthru
      _
    // Predicated region
    $region42: #{tpu_custom_call.1} parent=1 // pred_check
      _
    $region43: #{tpu_custom_call.1} parent=1 // pred_check_branch
      %97 = sbr.rel (0) target = $region45
    $region44: #{tpu_custom_call.1} parent=1 // pred_region
      %99 = dma.done [#allocation9], 16
    $region45: #{tpu_custom_call.1} parent=1 // pred_fallthru
      _
    %v100 = vld [vmem:[#allocation2] sm:$0xff]
    %v101 = vld [vmem:[#allocation2 + $0x8] sm:$0xff]
    %v102 = vld [vmem:[#allocation2 + $0x10] sm:$0xff]
    %v103 = vld [vmem:[#allocation2 + $0x18] sm:$0xff]
    %v104 = vld [vmem:[#allocation2 + $0x20] sm:$0xff]
    %v105 = vld [vmem:[#allocation2 + $0x28] sm:$0xff]
    %v106 = vld [vmem:[#allocation2 + $0x30] sm:$0xff]
    %v107 = vld [vmem:[#allocation2 + $0x38] sm:$0xff]
    %v108 = vld [vmem:[#allocation5] sm:$0xff]
    %v109 = vld [vmem:[#allocation5 + $0x8] sm:$0xff]
    %v110 = vld [vmem:[#allocation5 + $0x10] sm:$0xff]
    %v111 = vld [vmem:[#allocation5 + $0x18] sm:$0xff]
    %v112 = vld [vmem:[#allocation7] sm:$0x1]
    %v113 = vld [vmem:[#allocation8] sm:$0xff]
    %v114 = vld [vmem:[#allocation8 + $0x8] sm:$0xff]
    %v115 = vld [vmem:[#allocation8 + $0x10] sm:$0xff]
    %v116 = vld [vmem:[#allocation8 + $0x18] sm:$0xff]
    %v117 = vld [vmem:[#allocation10] sm:$0x1]
    %v118 = vlaneseq
    %v119 = vand.u32 %v118, 127
    %vm120 = vcmp.eq.s32.totalorder %v119, 0
    %v121 = vsel %vm120, 1, 0
    %v122 = vcvt.s32.f32 %v121
    %v123 = vld [vmem:[%s5] sm:$0xf]
    %vm124 = vcmask 523264
    %v126 = vsel %vm124, %v122, 0
    %128 = vmatpush.msra.mxu0 0.0
    %129 = vmatpush.msra.mxu0 0.0
    %130 = vmatpush.msra.mxu0 0.0
    %131 = vmatpush.msra.mxu0 0.0
    %132 = vmatpush.msra.mxu0 0.0
    %133 = vmatpush.msra.mxu0 0.0
    %134 = vmatpush.msra.mxu0 0.0
    %135 = vmatpush.msra.mxu0 0.0
    %136 = vmatpush.msra.mxu0 %v107
    %137 = vmatpush.msra.mxu0 %v106
    %138 = vmatpush.msra.mxu0 %v105
    %139 = vmatpush.msra.mxu0 %v104
    %140 = vmatpush.msra.mxu0 %v103
    %141 = vmatpush.msra.mxu0 %v102
    %142 = vmatpush.msra.mxu0 %v101
    %143 = vmatpush.msra.mxu0 %v100
    %144 = vmatmul.f32.gmra.mxu0 %v126
    %v145 = vpop.f32.mrf.mxu0
    %v146 = vadd.f32 0.0, %v145
    %147 = vdwg.mxu0
    %v149 = vperm.slane %v112, 0
    %vm151 = vcmask 261120
    %v153 = vsel %vm151, %v123, 0
    %155 = vmatpush.msra.mxu0 0.0
    %156 = vmatpush.msra.mxu0 0.0
    %157 = vmatpush.msra.mxu0 0.0
    %158 = vmatpush.msra.mxu0 0.0
    %159 = vmatpush.msra.mxu0 0.0
    %160 = vmatpush.msra.mxu0 0.0
    %161 = vmatpush.msra.mxu0 0.0
    %162 = vmatpush.msra.mxu0 0.0
    %163 = vmatpush.msra.mxu0 0.0
    %164 = vmatpush.msra.mxu0 0.0
    %165 = vmatpush.msra.mxu0 0.0
    %166 = vmatpush.msra.mxu0 0.0
    %167 = vmatpush.msra.mxu0 %v111
    %168 = vmatpush.msra.mxu0 %v110
    %169 = vmatpush.msra.mxu0 %v109
    %170 = vmatpush.msra.mxu0 %v108
    %171 = vmatmul.f32.gmra.mxu0 %v153
    %v172 = vpop.f32.mrf.mxu0
    %v173 = vadd.f32 %v149, %v172
    %174 = vdwg.mxu0
    %v175 = vadd.f32 %v146, %v173
    %v176 = vxor.u32 %v175, 2147483648
    %v177 = vmul.f32 %v176, 1.442695
    %v178 = vpow.pop %v177
    %v179 = vadd.f32 %v178, 1.0
    %v180 = vrcp.pop %v179
    %v181 = vmul.f32 %v179, %v180
    %v182 = vsub.f32 1.0, %v181
    %v183 = vmul.f32 %v180, %v182
    %v184 = vadd.f32 %v180, %v183
    %vm185 = vweird.f32 %v179
    %vm186 = vweird.f32 %v180
    %vm187 = vmor %vm185, %vm186
    %v188 = vsel %vm187, %v180, %v184
    %v189 = vand.u32 2147483647, %v179
    %vm190 = vcmp.eq.f32.partialorder %v189, 8.507059e+37
    %v191 = vand.u32 %v179, 2147483648
    %v192 = vor.u32 1.1754944e-38, %v191
    %v193 = vsel %vm190, %v192, %v188
    %v194 = vmul.f32 1.0, %v193
    %196 = vrot.lane.b32.xlu0 %v173, 64
    %v197 = vpop.permute.xlu0 %196
    %v199 = vmul.f32 %v194, %v197
    %201 = vrot.lane.b32.xlu0 %v199, 64
    %v202 = vpop.permute.xlu0 %201
    %v204 = vadd.f32 %v146, %v202
    %v205 = vtanh.pop %v204
    %v206 = vsub.f32 1.0, %v194
    %208 = vrot.lane.b32.xlu0 %v205, 96
    %v209 = vpop.permute.xlu0 %208
    %v211 = vmul.f32 %v206, %v209
    %212 = vrot.lane.b32.xlu0 %v123, 32
    %v213 = vpop.permute.xlu0 %212
    %v215 = vmul.f32 %v194, %v213
    %v216 = vadd.f32 %v211, %v215
    %v218 = vperm.slane %v117, 0
    %221 = vrot.lane.b32.xlu0 %v216, 96
    %v222 = vpop.permute.xlu0 %221
    %v223 = vsel %vm151, %v222, 0
    %225 = vmatpush.msra.mxu0 0.0
    %226 = vmatpush.msra.mxu0 0.0
    %227 = vmatpush.msra.mxu0 0.0
    %228 = vmatpush.msra.mxu0 0.0
    %229 = vmatpush.msra.mxu0 0.0
    %230 = vmatpush.msra.mxu0 0.0
    %231 = vmatpush.msra.mxu0 0.0
    %232 = vmatpush.msra.mxu0 0.0
    %233 = vmatpush.msra.mxu0 0.0
    %234 = vmatpush.msra.mxu0 0.0
    %235 = vmatpush.msra.mxu0 0.0
    %236 = vmatpush.msra.mxu0 0.0
    %237 = vmatpush.msra.mxu0 %v116
    %238 = vmatpush.msra.mxu0 %v115
    %239 = vmatpush.msra.mxu0 %v114
    %240 = vmatpush.msra.mxu0 %v113
    %241 = vmatmul.f32.gmra.mxu0 %v223
    %v242 = vpop.f32.mrf.mxu0
    %v243 = vadd.f32 %v218, %v242
    %244 = vdwg.mxu0
    %vm245 = vcmask 519168
    %v246 = vsel %vm245, %v243, -inf
    %247 = vmax.xlane.f32.xlu0 %v246
    %v248 = vpop.xlane.xlu0 %247
    %v249 = vsub.f32 %v243, %v248
    %v250 = vmul.f32 %v249, 1.442695
    %v251 = vpow.pop %v250
    %v252 = vsel %vm245, %v251, 0.0
    %253 = vadd.xlane.f32.xlu0 %v252
    %v254 = vpop.xlane.xlu0 %253
    %v255 = vlog2.pop %v254
    %v256 = vmul.f32 %v255, 0.6931472
    %v257 = vadd.f32 %v248, %v256
    %v258 = vsub.f32 %v243, %v257
    %v260 = vrot.slane %v258, 1
    %v261 = vrot.slane %v258, 2
    %v262 = vrot.slane %v258, 3
    %vm266 = vcmask 516096
    %267 = vst.msk [vmem:[%s6] sm:$0x1] %vm266, %v258
    %268 = vst.msk [vmem:[%s6 + $0x10] sm:$0x1] %vm266, %v260
    %269 = vst.msk [vmem:[%s6 + $0x20] sm:$0x1] %vm266, %v261
    %270 = vst.msk [vmem:[%s6 + $0x30] sm:$0x1] %vm266, %v262
    %vm271 = vcmp.ge.f32.partialorder %v243, %v248
    %v272 = vsel %vm271, %v119, 64
    %v273 = vsel %vm245, %v272, 2147483647
    %v274 = vand.u32 %v273, 65535
    %v275 = vshra.s32 %v273, 16
    %v276 = vcvt.s32.f32 %v274
    %v277 = vcvt.s32.f32 %v275
    %278 = vmin.xlane.f32.xlu0 %v277
    %v279 = vpop.xlane.xlu0 %278
    %vm280 = vcmp.eq.f32.partialorder %v277, %v279
    %v281 = vsel %vm280, %v276, inf
    %282 = vmin.xlane.f32.xlu0 %v281
    %v283 = vpop.xlane.xlu0 %282
    %v284 = vcvt.f32.s32 %v283
    %v285 = vcvt.f32.s32 %v279
    %v286 = vshll.u32 %v285, 16
    %v287 = vadd.s32 %v286, %v284
    %vm288 = vcmp.eq.s32.totalorder %v119, %v287
    %v289 = vsel %vm288, 1, 0
    %v290 = vcvt.s32.f32 %v289
    %v292 = vsel %vm124, %v290, 0
    %294 = vmatpush.msra.mxu0 0.0
    %295 = vmatpush.msra.mxu0 0.0
    %296 = vmatpush.msra.mxu0 0.0
    %297 = vmatpush.msra.mxu0 0.0
    %298 = vmatpush.msra.mxu0 0.0
    %299 = vmatpush.msra.mxu0 0.0
    %300 = vmatpush.msra.mxu0 0.0
    %301 = vmatpush.msra.mxu0 0.0
    %302 = vmatpush.msra.mxu0 %v107
    %303 = vmatpush.msra.mxu0 %v106
    %304 = vmatpush.msra.mxu0 %v105
    %305 = vmatpush.msra.mxu0 %v104
    %306 = vmatpush.msra.mxu0 %v103
    %307 = vmatpush.msra.mxu0 %v102
    %308 = vmatpush.msra.mxu0 %v101
    %309 = vmatpush.msra.mxu0 %v100
    %310 = vmatmul.f32.gmra.mxu0 %v292
    %v311 = vpop.f32.mrf.mxu0
    %v312 = vadd.f32 0.0, %v311
    %313 = vdwg.mxu0
    %314 = vmatpush.msra.mxu0 0.0
    %315 = vmatpush.msra.mxu0 0.0
    %316 = vmatpush.msra.mxu0 0.0
    %317 = vmatpush.msra.mxu0 0.0
    %318 = vmatpush.msra.mxu0 0.0
    %319 = vmatpush.msra.mxu0 0.0
    %320 = vmatpush.msra.mxu0 0.0
    %321 = vmatpush.msra.mxu0 0.0
    %322 = vmatpush.msra.mxu0 0.0
    %323 = vmatpush.msra.mxu0 0.0
    %324 = vmatpush.msra.mxu0 0.0
    %325 = vmatpush.msra.mxu0 0.0
    %326 = vmatpush.msra.mxu0 %v111
    %327 = vmatpush.msra.mxu0 %v110
    %328 = vmatpush.msra.mxu0 %v109
    %329 = vmatpush.msra.mxu0 %v108
    %330 = vmatmul.f32.gmra.mxu0 %v223
    %v331 = vpop.f32.mrf.mxu0
    %v332 = vadd.f32 %v149, %v331
    %333 = vdwg.mxu0
    %v334 = vadd.f32 %v312, %v332
    %v335 = vxor.u32 %v334, 2147483648
    %v336 = vmul.f32 %v335, 1.442695
    %v337 = vpow.pop %v336
    %v338 = vadd.f32 %v337, 1.0
    %v339 = vrcp.pop %v338
    %v340 = vmul.f32 %v338, %v339
    %v341 = vsub.f32 1.0, %v340
    %v342 = vmul.f32 %v339, %v341
    %v343 = vadd.f32 %v339, %v342
    %vm344 = vweird.f32 %v338
    %vm345 = vweird.f32 %v339
    %vm346 = vmor %vm344, %vm345
    %v347 = vsel %vm346, %v339, %v343
    %v348 = vand.u32 2147483647, %v338
    %vm349 = vcmp.eq.f32.partialorder %v348, 8.507059e+37
    %v350 = vand.u32 %v338, 2147483648
    %v351 = vor.u32 1.1754944e-38, %v350
    %v352 = vsel %vm349, %v351, %v347
    %v353 = vmul.f32 1.0, %v352
    %355 = vrot.lane.b32.xlu0 %v332, 64
    %v356 = vpop.permute.xlu0 %355
    %v358 = vmul.f32 %v353, %v356
    %360 = vrot.lane.b32.xlu0 %v358, 64
    %v361 = vpop.permute.xlu0 %360
    %v363 = vadd.f32 %v312, %v361
    %v364 = vtanh.pop %v363
    %v365 = vsub.f32 1.0, %v353
    %367 = vrot.lane.b32.xlu0 %v364, 96
    %v368 = vpop.permute.xlu0 %367
    %v370 = vmul.f32 %v365, %v368
    %v371 = vmul.f32 %v353, %v216
    %v372 = vadd.f32 %v370, %v371
    %374 = vrot.lane.b32.xlu0 %v372, 96
    %v375 = vpop.permute.xlu0 %374
    %v376 = vsel %vm151, %v375, 0
    %378 = vmatpush.msra.mxu0 0.0
    %379 = vmatpush.msra.mxu0 0.0
    %380 = vmatpush.msra.mxu0 0.0
    %381 = vmatpush.msra.mxu0 0.0
    %382 = vmatpush.msra.mxu0 0.0
    %383 = vmatpush.msra.mxu0 0.0
    %384 = vmatpush.msra.mxu0 0.0
    %385 = vmatpush.msra.mxu0 0.0
    %386 = vmatpush.msra.mxu0 0.0
    %387 = vmatpush.msra.mxu0 0.0
    %388 = vmatpush.msra.mxu0 0.0
    %389 = vmatpush.msra.mxu0 0.0
    %390 = vmatpush.msra.mxu0 %v116
    %391 = vmatpush.msra.mxu0 %v115
    %392 = vmatpush.msra.mxu0 %v114
    %393 = vmatpush.msra.mxu0 %v113
    %394 = vmatmul.f32.gmra.mxu0 %v376
    %v395 = vpop.f32.mrf.mxu0
    %v396 = vadd.f32 %v218, %v395
    %397 = vdwg.mxu0
    %v398 = vsel %vm245, %v396, -inf
    %399 = vmax.xlane.f32.xlu0 %v398
    %v400 = vpop.xlane.xlu0 %399
    %v401 = vsub.f32 %v396, %v400
    %v402 = vmul.f32 %v401, 1.442695
    %v403 = vpow.pop %v402
    %v404 = vsel %vm245, %v403, 0.0
    %405 = vadd.xlane.f32.xlu0 %v404
    %v406 = vpop.xlane.xlu0 %405
    %v407 = vlog2.pop %v406
    %v408 = vmul.f32 %v407, 0.6931472
    %v409 = vadd.f32 %v400, %v408
    %v410 = vsub.f32 %v396, %v409
    %v412 = vrot.slane %v410, 1
    %v413 = vrot.slane %v410, 2
    %v414 = vrot.slane %v410, 3
    %418 = vst.msk [vmem:[%s6 + $0x1] sm:$0x1] %vm266, %v410
    %419 = vst.msk [vmem:[%s6 + $0x11] sm:$0x1] %vm266, %v412
    %420 = vst.msk [vmem:[%s6 + $0x21] sm:$0x1] %vm266, %v413
    %421 = vst.msk [vmem:[%s6 + $0x31] sm:$0x1] %vm266, %v414
    %vm422 = vcmp.ge.f32.partialorder %v396, %v400
    %v423 = vsel %vm422, %v119, 64
    %v424 = vsel %vm245, %v423, 2147483647
    %v425 = vand.u32 %v424, 65535
    %v426 = vshra.s32 %v424, 16
    %v427 = vcvt.s32.f32 %v425
    %v428 = vcvt.s32.f32 %v426
    %429 = vmin.xlane.f32.xlu0 %v428
    %v430 = vpop.xlane.xlu0 %429
    %vm431 = vcmp.eq.f32.partialorder %v428, %v430
    %v432 = vsel %vm431, %v427, inf
    %433 = vmin.xlane.f32.xlu0 %v432
    %v434 = vpop.xlane.xlu0 %433
    %v435 = vcvt.f32.s32 %v434
    %v436 = vcvt.f32.s32 %v430
    %v437 = vshll.u32 %v436, 16
    %v438 = vadd.s32 %v437, %v435
    %vm439 = vcmp.eq.s32.totalorder %v119, %v438
    %v440 = vsel %vm439, 1, 0
    %v441 = vcvt.s32.f32 %v440
    %v443 = vsel %vm124, %v441, 0
    %445 = vmatpush.msra.mxu0 0.0
    %446 = vmatpush.msra.mxu0 0.0
    %447 = vmatpush.msra.mxu0 0.0
    %448 = vmatpush.msra.mxu0 0.0
    %449 = vmatpush.msra.mxu0 0.0
    %450 = vmatpush.msra.mxu0 0.0
    %451 = vmatpush.msra.mxu0 0.0
    %452 = vmatpush.msra.mxu0 0.0
    %453 = vmatpush.msra.mxu0 %v107
    %454 = vmatpush.msra.mxu0 %v106
    %455 = vmatpush.msra.mxu0 %v105
    %456 = vmatpush.msra.mxu0 %v104
    %457 = vmatpush.msra.mxu0 %v103
    %458 = vmatpush.msra.mxu0 %v102
    %459 = vmatpush.msra.mxu0 %v101
    %460 = vmatpush.msra.mxu0 %v100
    %461 = vmatmul.f32.gmra.mxu0 %v443
    %v462 = vpop.f32.mrf.mxu0
    %v463 = vadd.f32 0.0, %v462
    %464 = vdwg.mxu0
    %465 = vmatpush.msra.mxu0 0.0
    %466 = vmatpush.msra.mxu0 0.0
    %467 = vmatpush.msra.mxu0 0.0
    %468 = vmatpush.msra.mxu0 0.0
    %469 = vmatpush.msra.mxu0 0.0
    %470 = vmatpush.msra.mxu0 0.0
    %471 = vmatpush.msra.mxu0 0.0
    %472 = vmatpush.msra.mxu0 0.0
    %473 = vmatpush.msra.mxu0 0.0
    %474 = vmatpush.msra.mxu0 0.0
    %475 = vmatpush.msra.mxu0 0.0
    %476 = vmatpush.msra.mxu0 0.0
    %477 = vmatpush.msra.mxu0 %v111
    %478 = vmatpush.msra.mxu0 %v110
    %479 = vmatpush.msra.mxu0 %v109
    %480 = vmatpush.msra.mxu0 %v108
    %481 = vmatmul.f32.gmra.mxu0 %v376
    %v482 = vpop.f32.mrf.mxu0
    %v483 = vadd.f32 %v149, %v482
    %484 = vdwg.mxu0
    %v485 = vadd.f32 %v463, %v483
    %v486 = vxor.u32 %v485, 2147483648
    %v487 = vmul.f32 %v486, 1.442695
    %v488 = vpow.pop %v487
    %v489 = vadd.f32 %v488, 1.0
    %v490 = vrcp.pop %v489
    %v491 = vmul.f32 %v489, %v490
    %v492 = vsub.f32 1.0, %v491
    %v493 = vmul.f32 %v490, %v492
    %v494 = vadd.f32 %v490, %v493
    %vm495 = vweird.f32 %v489
    %vm496 = vweird.f32 %v490
    %vm497 = vmor %vm495, %vm496
    %v498 = vsel %vm497, %v490, %v494
    %v499 = vand.u32 2147483647, %v489
    %vm500 = vcmp.eq.f32.partialorder %v499, 8.507059e+37
    %v501 = vand.u32 %v489, 2147483648
    %v502 = vor.u32 1.1754944e-38, %v501
    %v503 = vsel %vm500, %v502, %v498
    %v504 = vmul.f32 1.0, %v503
    %506 = vrot.lane.b32.xlu0 %v483, 64
    %v507 = vpop.permute.xlu0 %506
    %v509 = vmul.f32 %v504, %v507
    %511 = vrot.lane.b32.xlu0 %v509, 64
    %v512 = vpop.permute.xlu0 %511
    %v514 = vadd.f32 %v463, %v512
    %v515 = vtanh.pop %v514
    %v516 = vsub.f32 1.0, %v504
    %518 = vrot.lane.b32.xlu0 %v515, 96
    %v519 = vpop.permute.xlu0 %518
    %v521 = vmul.f32 %v516, %v519
    %v522 = vmul.f32 %v504, %v372
    %v523 = vadd.f32 %v521, %v522
    %525 = vrot.lane.b32.xlu0 %v523, 96
    %v526 = vpop.permute.xlu0 %525
    %v527 = vsel %vm151, %v526, 0
    %529 = vmatpush.msra.mxu0 0.0
    %530 = vmatpush.msra.mxu0 0.0
    %531 = vmatpush.msra.mxu0 0.0
    %532 = vmatpush.msra.mxu0 0.0
    %533 = vmatpush.msra.mxu0 0.0
    %534 = vmatpush.msra.mxu0 0.0
    %535 = vmatpush.msra.mxu0 0.0
    %536 = vmatpush.msra.mxu0 0.0
    %537 = vmatpush.msra.mxu0 0.0
    %538 = vmatpush.msra.mxu0 0.0
    %539 = vmatpush.msra.mxu0 0.0
    %540 = vmatpush.msra.mxu0 0.0
    %541 = vmatpush.msra.mxu0 %v116
    %542 = vmatpush.msra.mxu0 %v115
    %543 = vmatpush.msra.mxu0 %v114
    %544 = vmatpush.msra.mxu0 %v113
    %545 = vmatmul.f32.gmra.mxu0 %v527
    %v546 = vpop.f32.mrf.mxu0
    %v547 = vadd.f32 %v218, %v546
    %548 = vdwg.mxu0
    %v549 = vsel %vm245, %v547, -inf
    %550 = vmax.xlane.f32.xlu0 %v549
    %v551 = vpop.xlane.xlu0 %550
    %v552 = vsub.f32 %v547, %v551
    %v553 = vmul.f32 %v552, 1.442695
    %v554 = vpow.pop %v553
    %v555 = vsel %vm245, %v554, 0.0
    %556 = vadd.xlane.f32.xlu0 %v555
    %v557 = vpop.xlane.xlu0 %556
    %v558 = vlog2.pop %v557
    %v559 = vmul.f32 %v558, 0.6931472
    %v560 = vadd.f32 %v551, %v559
    %v561 = vsub.f32 %v547, %v560
    %v563 = vrot.slane %v561, 1
    %v564 = vrot.slane %v561, 2
    %v565 = vrot.slane %v561, 3
    %569 = vst.msk [vmem:[%s6 + $0x2] sm:$0x1] %vm266, %v561
    %570 = vst.msk [vmem:[%s6 + $0x12] sm:$0x1] %vm266, %v563
    %571 = vst.msk [vmem:[%s6 + $0x22] sm:$0x1] %vm266, %v564
    %572 = vst.msk [vmem:[%s6 + $0x32] sm:$0x1] %vm266, %v565
    %vm573 = vcmp.ge.f32.partialorder %v547, %v551
    %v574 = vsel %vm573, %v119, 64
    %v575 = vsel %vm245, %v574, 2147483647
    %v576 = vand.u32 %v575, 65535
    %v577 = vshra.s32 %v575, 16
    %v578 = vcvt.s32.f32 %v576
    %v579 = vcvt.s32.f32 %v577
    %580 = vmin.xlane.f32.xlu0 %v579
    %v581 = vpop.xlane.xlu0 %580
    %vm582 = vcmp.eq.f32.partialorder %v579, %v581
    %v583 = vsel %vm582, %v578, inf
    %584 = vmin.xlane.f32.xlu0 %v583
    %v585 = vpop.xlane.xlu0 %584
    %v586 = vcvt.f32.s32 %v585
    %v587 = vcvt.f32.s32 %v581
    %v588 = vshll.u32 %v587, 16
    %v589 = vadd.s32 %v588, %v586
    %vm590 = vcmp.eq.s32.totalorder %v119, %v589
    %v591 = vsel %vm590, 1, 0
    %v592 = vcvt.s32.f32 %v591
    %v594 = vsel %vm124, %v592, 0
    %596 = vmatpush.msra.mxu0 0.0
    %597 = vmatpush.msra.mxu0 0.0
    %598 = vmatpush.msra.mxu0 0.0
    %599 = vmatpush.msra.mxu0 0.0
    %600 = vmatpush.msra.mxu0 0.0
    %601 = vmatpush.msra.mxu0 0.0
    %602 = vmatpush.msra.mxu0 0.0
    %603 = vmatpush.msra.mxu0 0.0
    %604 = vmatpush.msra.mxu0 %v107
    %605 = vmatpush.msra.mxu0 %v106
    %606 = vmatpush.msra.mxu0 %v105
    %607 = vmatpush.msra.mxu0 %v104
    %608 = vmatpush.msra.mxu0 %v103
    %609 = vmatpush.msra.mxu0 %v102
    %610 = vmatpush.msra.mxu0 %v101
    %611 = vmatpush.msra.mxu0 %v100
    %612 = vmatmul.f32.gmra.mxu0 %v594
    %v613 = vpop.f32.mrf.mxu0
    %v614 = vadd.f32 0.0, %v613
    %615 = vdwg.mxu0
    %616 = vmatpush.msra.mxu0 0.0
    %617 = vmatpush.msra.mxu0 0.0
    %618 = vmatpush.msra.mxu0 0.0
    %619 = vmatpush.msra.mxu0 0.0
    %620 = vmatpush.msra.mxu0 0.0
    %621 = vmatpush.msra.mxu0 0.0
    %622 = vmatpush.msra.mxu0 0.0
    %623 = vmatpush.msra.mxu0 0.0
    %624 = vmatpush.msra.mxu0 0.0
    %625 = vmatpush.msra.mxu0 0.0
    %626 = vmatpush.msra.mxu0 0.0
    %627 = vmatpush.msra.mxu0 0.0
    %628 = vmatpush.msra.mxu0 %v111
    %629 = vmatpush.msra.mxu0 %v110
    %630 = vmatpush.msra.mxu0 %v109
    %631 = vmatpush.msra.mxu0 %v108
    %632 = vmatmul.f32.gmra.mxu0 %v527
    %v633 = vpop.f32.mrf.mxu0
    %v634 = vadd.f32 %v149, %v633
    %635 = vdwg.mxu0
    %v636 = vadd.f32 %v614, %v634
    %v637 = vxor.u32 %v636, 2147483648
    %v638 = vmul.f32 %v637, 1.442695
    %v639 = vpow.pop %v638
    %v640 = vadd.f32 %v639, 1.0
    %v641 = vrcp.pop %v640
    %v642 = vmul.f32 %v640, %v641
    %v643 = vsub.f32 1.0, %v642
    %v644 = vmul.f32 %v641, %v643
    %v645 = vadd.f32 %v641, %v644
    %vm646 = vweird.f32 %v640
    %vm647 = vweird.f32 %v641
    %vm648 = vmor %vm646, %vm647
    %v649 = vsel %vm648, %v641, %v645
    %v650 = vand.u32 2147483647, %v640
    %vm651 = vcmp.eq.f32.partialorder %v650, 8.507059e+37
    %v652 = vand.u32 %v640, 2147483648
    %v653 = vor.u32 1.1754944e-38, %v652
    %v654 = vsel %vm651, %v653, %v649
    %v655 = vmul.f32 1.0, %v654
    %657 = vrot.lane.b32.xlu0 %v634, 64
    %v658 = vpop.permute.xlu0 %657
    %v660 = vmul.f32 %v655, %v658
    %662 = vrot.lane.b32.xlu0 %v660, 64
    %v663 = vpop.permute.xlu0 %662
    %v665 = vadd.f32 %v614, %v663
    %v666 = vtanh.pop %v665
    %v667 = vsub.f32 1.0, %v655
    %669 = vrot.lane.b32.xlu0 %v666, 96
    %v670 = vpop.permute.xlu0 %669
    %v672 = vmul.f32 %v667, %v670
    %v673 = vmul.f32 %v655, %v523
    %v674 = vadd.f32 %v672, %v673
    %676 = vrot.lane.b32.xlu0 %v674, 96
    %v677 = vpop.permute.xlu0 %676
    %v678 = vsel %vm151, %v677, 0
    %680 = vmatpush.msra.mxu0 0.0
    %681 = vmatpush.msra.mxu0 0.0
    %682 = vmatpush.msra.mxu0 0.0
    %683 = vmatpush.msra.mxu0 0.0
    %684 = vmatpush.msra.mxu0 0.0
    %685 = vmatpush.msra.mxu0 0.0
    %686 = vmatpush.msra.mxu0 0.0
    %687 = vmatpush.msra.mxu0 0.0
    %688 = vmatpush.msra.mxu0 0.0
    %689 = vmatpush.msra.mxu0 0.0
    %690 = vmatpush.msra.mxu0 0.0
    %691 = vmatpush.msra.mxu0 0.0
    %692 = vmatpush.msra.mxu0 %v116
    %693 = vmatpush.msra.mxu0 %v115
    %694 = vmatpush.msra.mxu0 %v114
    %695 = vmatpush.msra.mxu0 %v113
    %696 = vmatmul.f32.gmra.mxu0 %v678
    %v697 = vpop.f32.mrf.mxu0
    %v698 = vadd.f32 %v218, %v697
    %699 = vdwg.mxu0
    %v700 = vsel %vm245, %v698, -inf
    %701 = vmax.xlane.f32.xlu0 %v700
    %v702 = vpop.xlane.xlu0 %701
    %v703 = vsub.f32 %v698, %v702
    %v704 = vmul.f32 %v703, 1.442695
    %v705 = vpow.pop %v704
    %v706 = vsel %vm245, %v705, 0.0
    %707 = vadd.xlane.f32.xlu0 %v706
    %v708 = vpop.xlane.xlu0 %707
    %v709 = vlog2.pop %v708
    %v710 = vmul.f32 %v709, 0.6931472
    %v711 = vadd.f32 %v702, %v710
    %v712 = vsub.f32 %v698, %v711
    %v714 = vrot.slane %v712, 1
    %v715 = vrot.slane %v712, 2
    %v716 = vrot.slane %v712, 3
    %720 = vst.msk [vmem:[%s6 + $0x3] sm:$0x1] %vm266, %v712
    %721 = vst.msk [vmem:[%s6 + $0x13] sm:$0x1] %vm266, %v714
    %722 = vst.msk [vmem:[%s6 + $0x23] sm:$0x1] %vm266, %v715
    %723 = vst.msk [vmem:[%s6 + $0x33] sm:$0x1] %vm266, %v716
    %vm724 = vcmp.ge.f32.partialorder %v698, %v702
    %v725 = vsel %vm724, %v119, 64
    %v726 = vsel %vm245, %v725, 2147483647
    %v727 = vand.u32 %v726, 65535
    %v728 = vshra.s32 %v726, 16
    %v729 = vcvt.s32.f32 %v727
    %v730 = vcvt.s32.f32 %v728
    %731 = vmin.xlane.f32.xlu0 %v730
    %v732 = vpop.xlane.xlu0 %731
    %vm733 = vcmp.eq.f32.partialorder %v730, %v732
    %v734 = vsel %vm733, %v729, inf
    %735 = vmin.xlane.f32.xlu0 %v734
    %v736 = vpop.xlane.xlu0 %735
    %v737 = vcvt.f32.s32 %v736
    %v738 = vcvt.f32.s32 %v732
    %v739 = vshll.u32 %v738, 16
    %v740 = vadd.s32 %v739, %v737
    %vm741 = vcmp.eq.s32.totalorder %v119, %v740
    %v742 = vsel %vm741, 1, 0
    %v743 = vcvt.s32.f32 %v742
    %v745 = vsel %vm124, %v743, 0
    %747 = vmatpush.msra.mxu0 0.0
    %748 = vmatpush.msra.mxu0 0.0
    %749 = vmatpush.msra.mxu0 0.0
    %750 = vmatpush.msra.mxu0 0.0
    %751 = vmatpush.msra.mxu0 0.0
    %752 = vmatpush.msra.mxu0 0.0
    %753 = vmatpush.msra.mxu0 0.0
    %754 = vmatpush.msra.mxu0 0.0
    %755 = vmatpush.msra.mxu0 %v107
    %756 = vmatpush.msra.mxu0 %v106
    %757 = vmatpush.msra.mxu0 %v105
    %758 = vmatpush.msra.mxu0 %v104
    %759 = vmatpush.msra.mxu0 %v103
    %760 = vmatpush.msra.mxu0 %v102
    %761 = vmatpush.msra.mxu0 %v101
    %762 = vmatpush.msra.mxu0 %v100
    %763 = vmatmul.f32.gmra.mxu0 %v745
    %v764 = vpop.f32.mrf.mxu0
    %v765 = vadd.f32 0.0, %v764
    %766 = vdwg.mxu0
    %767 = vmatpush.msra.mxu0 0.0
    %768 = vmatpush.msra.mxu0 0.0
    %769 = vmatpush.msra.mxu0 0.0
    %770 = vmatpush.msra.mxu0 0.0
    %771 = vmatpush.msra.mxu0 0.0
    %772 = vmatpush.msra.mxu0 0.0
    %773 = vmatpush.msra.mxu0 0.0
    %774 = vmatpush.msra.mxu0 0.0
    %775 = vmatpush.msra.mxu0 0.0
    %776 = vmatpush.msra.mxu0 0.0
    %777 = vmatpush.msra.mxu0 0.0
    %778 = vmatpush.msra.mxu0 0.0
    %779 = vmatpush.msra.mxu0 %v111
    %780 = vmatpush.msra.mxu0 %v110
    %781 = vmatpush.msra.mxu0 %v109
    %782 = vmatpush.msra.mxu0 %v108
    %783 = vmatmul.f32.gmra.mxu0 %v678
    %v784 = vpop.f32.mrf.mxu0
    %v785 = vadd.f32 %v149, %v784
    %786 = vdwg.mxu0
    %v787 = vadd.f32 %v765, %v785
    %v788 = vxor.u32 %v787, 2147483648
    %v789 = vmul.f32 %v788, 1.442695
    %v790 = vpow.pop %v789
    %v791 = vadd.f32 %v790, 1.0
    %v792 = vrcp.pop %v791
    %v793 = vmul.f32 %v791, %v792
    %v794 = vsub.f32 1.0, %v793
    %v795 = vmul.f32 %v792, %v794
    %v796 = vadd.f32 %v792, %v795
    %vm797 = vweird.f32 %v791
    %vm798 = vweird.f32 %v792
    %vm799 = vmor %vm797, %vm798
    %v800 = vsel %vm799, %v792, %v796
    %v801 = vand.u32 2147483647, %v791
    %vm802 = vcmp.eq.f32.partialorder %v801, 8.507059e+37
    %v803 = vand.u32 %v791, 2147483648
    %v804 = vor.u32 1.1754944e-38, %v803
    %v805 = vsel %vm802, %v804, %v800
    %v806 = vmul.f32 1.0, %v805
    %808 = vrot.lane.b32.xlu0 %v785, 64
    %v809 = vpop.permute.xlu0 %808
    %v811 = vmul.f32 %v806, %v809
    %813 = vrot.lane.b32.xlu0 %v811, 64
    %v814 = vpop.permute.xlu0 %813
    %v816 = vadd.f32 %v765, %v814
    %v817 = vtanh.pop %v816
    %v818 = vsub.f32 1.0, %v806
    %820 = vrot.lane.b32.xlu0 %v817, 96
    %v821 = vpop.permute.xlu0 %820
    %v823 = vmul.f32 %v818, %v821
    %v824 = vmul.f32 %v806, %v674
    %v825 = vadd.f32 %v823, %v824
    %827 = vrot.lane.b32.xlu0 %v825, 96
    %v828 = vpop.permute.xlu0 %827
    %v829 = vsel %vm151, %v828, 0
    %831 = vmatpush.msra.mxu0 0.0
    %832 = vmatpush.msra.mxu0 0.0
    %833 = vmatpush.msra.mxu0 0.0
    %834 = vmatpush.msra.mxu0 0.0
    %835 = vmatpush.msra.mxu0 0.0
    %836 = vmatpush.msra.mxu0 0.0
    %837 = vmatpush.msra.mxu0 0.0
    %838 = vmatpush.msra.mxu0 0.0
    %839 = vmatpush.msra.mxu0 0.0
    %840 = vmatpush.msra.mxu0 0.0
    %841 = vmatpush.msra.mxu0 0.0
    %842 = vmatpush.msra.mxu0 0.0
    %843 = vmatpush.msra.mxu0 %v116
    %844 = vmatpush.msra.mxu0 %v115
    %845 = vmatpush.msra.mxu0 %v114
    %846 = vmatpush.msra.mxu0 %v113
    %847 = vmatmul.f32.gmra.mxu0 %v829
    %v848 = vpop.f32.mrf.mxu0
    %v849 = vadd.f32 %v218, %v848
    %850 = vdwg.mxu0
    %v851 = vsel %vm245, %v849, -inf
    %852 = vmax.xlane.f32.xlu0 %v851
    %v853 = vpop.xlane.xlu0 %852
    %v854 = vsub.f32 %v849, %v853
    %v855 = vmul.f32 %v854, 1.442695
    %v856 = vpow.pop %v855
    %v857 = vsel %vm245, %v856, 0.0
    %858 = vadd.xlane.f32.xlu0 %v857
    %v859 = vpop.xlane.xlu0 %858
    %v860 = vlog2.pop %v859
    %v861 = vmul.f32 %v860, 0.6931472
    %v862 = vadd.f32 %v853, %v861
    %v863 = vsub.f32 %v849, %v862
    %v865 = vrot.slane %v863, 1
    %v866 = vrot.slane %v863, 2
    %v867 = vrot.slane %v863, 3
    %871 = vst.msk [vmem:[%s6 + $0x4] sm:$0x1] %vm266, %v863
    %872 = vst.msk [vmem:[%s6 + $0x14] sm:$0x1] %vm266, %v865
    %873 = vst.msk [vmem:[%s6 + $0x24] sm:$0x1] %vm266, %v866
    %874 = vst.msk [vmem:[%s6 + $0x34] sm:$0x1] %vm266, %v867
    %vm875 = vcmp.ge.f32.partialorder %v849, %v853
    %v876 = vsel %vm875, %v119, 64
    %v877 = vsel %vm245, %v876, 2147483647
    %v878 = vand.u32 %v877, 65535
    %v879 = vshra.s32 %v877, 16
    %v880 = vcvt.s32.f32 %v878
    %v881 = vcvt.s32.f32 %v879
    %882 = vmin.xlane.f32.xlu0 %v881
    %v883 = vpop.xlane.xlu0 %882
    %vm884 = vcmp.eq.f32.partialorder %v881, %v883
    %v885 = vsel %vm884, %v880, inf
    %886 = vmin.xlane.f32.xlu0 %v885
    %v887 = vpop.xlane.xlu0 %886
    %v888 = vcvt.f32.s32 %v887
    %v889 = vcvt.f32.s32 %v883
    %v890 = vshll.u32 %v889, 16
    %v891 = vadd.s32 %v890, %v888
    %vm892 = vcmp.eq.s32.totalorder %v119, %v891
    %v893 = vsel %vm892, 1, 0
    %v894 = vcvt.s32.f32 %v893
    %v896 = vsel %vm124, %v894, 0
    %898 = vmatpush.msra.mxu0 0.0
    %899 = vmatpush.msra.mxu0 0.0
    %900 = vmatpush.msra.mxu0 0.0
    %901 = vmatpush.msra.mxu0 0.0
    %902 = vmatpush.msra.mxu0 0.0
    %903 = vmatpush.msra.mxu0 0.0
    %904 = vmatpush.msra.mxu0 0.0
    %905 = vmatpush.msra.mxu0 0.0
    %906 = vmatpush.msra.mxu0 %v107
    %907 = vmatpush.msra.mxu0 %v106
    %908 = vmatpush.msra.mxu0 %v105
    %909 = vmatpush.msra.mxu0 %v104
    %910 = vmatpush.msra.mxu0 %v103
    %911 = vmatpush.msra.mxu0 %v102
    %912 = vmatpush.msra.mxu0 %v101
    %913 = vmatpush.msra.mxu0 %v100
    %914 = vmatmul.f32.gmra.mxu0 %v896
    %v915 = vpop.f32.mrf.mxu0
    %v916 = vadd.f32 0.0, %v915
    %917 = vdwg.mxu0
    %918 = vmatpush.msra.mxu0 0.0
    %919 = vmatpush.msra.mxu0 0.0
    %920 = vmatpush.msra.mxu0 0.0
    %921 = vmatpush.msra.mxu0 0.0
    %922 = vmatpush.msra.mxu0 0.0
    %923 = vmatpush.msra.mxu0 0.0
    %924 = vmatpush.msra.mxu0 0.0
    %925 = vmatpush.msra.mxu0 0.0
    %926 = vmatpush.msra.mxu0 0.0
    %927 = vmatpush.msra.mxu0 0.0
    %928 = vmatpush.msra.mxu0 0.0
    %929 = vmatpush.msra.mxu0 0.0
    %930 = vmatpush.msra.mxu0 %v111
    %931 = vmatpush.msra.mxu0 %v110
    %932 = vmatpush.msra.mxu0 %v109
    %933 = vmatpush.msra.mxu0 %v108
    %934 = vmatmul.f32.gmra.mxu0 %v829
    %v935 = vpop.f32.mrf.mxu0
    %v936 = vadd.f32 %v149, %v935
    %937 = vdwg.mxu0
    %v938 = vadd.f32 %v916, %v936
    %v939 = vxor.u32 %v938, 2147483648
    %v940 = vmul.f32 %v939, 1.442695
    %v941 = vpow.pop %v940
    %v942 = vadd.f32 %v941, 1.0
    %v943 = vrcp.pop %v942
    %v944 = vmul.f32 %v942, %v943
    %v945 = vsub.f32 1.0, %v944
    %v946 = vmul.f32 %v943, %v945
    %v947 = vadd.f32 %v943, %v946
    %vm948 = vweird.f32 %v942
    %vm949 = vweird.f32 %v943
    %vm950 = vmor %vm948, %vm949
    %v951 = vsel %vm950, %v943, %v947
    %v952 = vand.u32 2147483647, %v942
    %vm953 = vcmp.eq.f32.partialorder %v952, 8.507059e+37
    %v954 = vand.u32 %v942, 2147483648
    %v955 = vor.u32 1.1754944e-38, %v954
    %v956 = vsel %vm953, %v955, %v951
    %v957 = vmul.f32 1.0, %v956
    %959 = vrot.lane.b32.xlu0 %v936, 64
    %v960 = vpop.permute.xlu0 %959
    %v962 = vmul.f32 %v957, %v960
    %964 = vrot.lane.b32.xlu0 %v962, 64
    %v965 = vpop.permute.xlu0 %964
    %v967 = vadd.f32 %v916, %v965
    %v968 = vtanh.pop %v967
    %v969 = vsub.f32 1.0, %v957
    %971 = vrot.lane.b32.xlu0 %v968, 96
    %v972 = vpop.permute.xlu0 %971
    %v974 = vmul.f32 %v969, %v972
    %v975 = vmul.f32 %v957, %v825
    %v976 = vadd.f32 %v974, %v975
    %978 = vrot.lane.b32.xlu0 %v976, 96
    %v979 = vpop.permute.xlu0 %978
    %v980 = vsel %vm151, %v979, 0
    %982 = vmatpush.msra.mxu0 0.0
    %983 = vmatpush.msra.mxu0 0.0
    %984 = vmatpush.msra.mxu0 0.0
    %985 = vmatpush.msra.mxu0 0.0
    %986 = vmatpush.msra.mxu0 0.0
    %987 = vmatpush.msra.mxu0 0.0
    %988 = vmatpush.msra.mxu0 0.0
    %989 = vmatpush.msra.mxu0 0.0
    %990 = vmatpush.msra.mxu0 0.0
    %991 = vmatpush.msra.mxu0 0.0
    %992 = vmatpush.msra.mxu0 0.0
    %993 = vmatpush.msra.mxu0 0.0
    %994 = vmatpush.msra.mxu0 %v116
    %995 = vmatpush.msra.mxu0 %v115
    %996 = vmatpush.msra.mxu0 %v114
    %997 = vmatpush.msra.mxu0 %v113
    %998 = vmatmul.f32.gmra.mxu0 %v980
    %v999 = vpop.f32.mrf.mxu0
    %v1000 = vadd.f32 %v218, %v999
    %1001 = vdwg.mxu0
    %v1002 = vsel %vm245, %v1000, -inf
    %1003 = vmax.xlane.f32.xlu0 %v1002
    %v1004 = vpop.xlane.xlu0 %1003
    %v1005 = vsub.f32 %v1000, %v1004
    %v1006 = vmul.f32 %v1005, 1.442695
    %v1007 = vpow.pop %v1006
    %v1008 = vsel %vm245, %v1007, 0.0
    %1009 = vadd.xlane.f32.xlu0 %v1008
    %v1010 = vpop.xlane.xlu0 %1009
    %v1011 = vlog2.pop %v1010
    %v1012 = vmul.f32 %v1011, 0.6931472
    %v1013 = vadd.f32 %v1004, %v1012
    %v1014 = vsub.f32 %v1000, %v1013
    %v1016 = vrot.slane %v1014, 1
    %v1017 = vrot.slane %v1014, 2
    %v1018 = vrot.slane %v1014, 3
    %1022 = vst.msk [vmem:[%s6 + $0x5] sm:$0x1] %vm266, %v1014
    %1023 = vst.msk [vmem:[%s6 + $0x15] sm:$0x1] %vm266, %v1016
    %1024 = vst.msk [vmem:[%s6 + $0x25] sm:$0x1] %vm266, %v1017
    %1025 = vst.msk [vmem:[%s6 + $0x35] sm:$0x1] %vm266, %v1018
    %vm1026 = vcmp.ge.f32.partialorder %v1000, %v1004
    %v1027 = vsel %vm1026, %v119, 64
    %v1028 = vsel %vm245, %v1027, 2147483647
    %v1029 = vand.u32 %v1028, 65535
    %v1030 = vshra.s32 %v1028, 16
    %v1031 = vcvt.s32.f32 %v1029
    %v1032 = vcvt.s32.f32 %v1030
    %1033 = vmin.xlane.f32.xlu0 %v1032
    %v1034 = vpop.xlane.xlu0 %1033
    %vm1035 = vcmp.eq.f32.partialorder %v1032, %v1034
    %v1036 = vsel %vm1035, %v1031, inf
    %1037 = vmin.xlane.f32.xlu0 %v1036
    %v1038 = vpop.xlane.xlu0 %1037
    %v1039 = vcvt.f32.s32 %v1038
    %v1040 = vcvt.f32.s32 %v1034
    %v1041 = vshll.u32 %v1040, 16
    %v1042 = vadd.s32 %v1041, %v1039
    %vm1043 = vcmp.eq.s32.totalorder %v119, %v1042
    %v1044 = vsel %vm1043, 1, 0
    %v1045 = vcvt.s32.f32 %v1044
    %v1047 = vsel %vm124, %v1045, 0
    %1049 = vmatpush.msra.mxu0 0.0
    %1050 = vmatpush.msra.mxu0 0.0
    %1051 = vmatpush.msra.mxu0 0.0
    %1052 = vmatpush.msra.mxu0 0.0
    %1053 = vmatpush.msra.mxu0 0.0
    %1054 = vmatpush.msra.mxu0 0.0
    %1055 = vmatpush.msra.mxu0 0.0
    %1056 = vmatpush.msra.mxu0 0.0
    %1057 = vmatpush.msra.mxu0 %v107
    %1058 = vmatpush.msra.mxu0 %v106
    %1059 = vmatpush.msra.mxu0 %v105
    %1060 = vmatpush.msra.mxu0 %v104
    %1061 = vmatpush.msra.mxu0 %v103
    %1062 = vmatpush.msra.mxu0 %v102
    %1063 = vmatpush.msra.mxu0 %v101
    %1064 = vmatpush.msra.mxu0 %v100
    %1065 = vmatmul.f32.gmra.mxu0 %v1047
    %v1066 = vpop.f32.mrf.mxu0
    %v1067 = vadd.f32 0.0, %v1066
    %1068 = vdwg.mxu0
    %1069 = vmatpush.msra.mxu0 0.0
    %1070 = vmatpush.msra.mxu0 0.0
    %1071 = vmatpush.msra.mxu0 0.0
    %1072 = vmatpush.msra.mxu0 0.0
    %1073 = vmatpush.msra.mxu0 0.0
    %1074 = vmatpush.msra.mxu0 0.0
    %1075 = vmatpush.msra.mxu0 0.0
    %1076 = vmatpush.msra.mxu0 0.0
    %1077 = vmatpush.msra.mxu0 0.0
    %1078 = vmatpush.msra.mxu0 0.0
    %1079 = vmatpush.msra.mxu0 0.0
    %1080 = vmatpush.msra.mxu0 0.0
    %1081 = vmatpush.msra.mxu0 %v111
    %1082 = vmatpush.msra.mxu0 %v110
    %1083 = vmatpush.msra.mxu0 %v109
    %1084 = vmatpush.msra.mxu0 %v108
    %1085 = vmatmul.f32.gmra.mxu0 %v980
    %v1086 = vpop.f32.mrf.mxu0
    %v1087 = vadd.f32 %v149, %v1086
    %1088 = vdwg.mxu0
    %v1089 = vadd.f32 %v1067, %v1087
    %v1090 = vxor.u32 %v1089, 2147483648
    %v1091 = vmul.f32 %v1090, 1.442695
    %v1092 = vpow.pop %v1091
    %v1093 = vadd.f32 %v1092, 1.0
    %v1094 = vrcp.pop %v1093
    %v1095 = vmul.f32 %v1093, %v1094
    %v1096 = vsub.f32 1.0, %v1095
    %v1097 = vmul.f32 %v1094, %v1096
    %v1098 = vadd.f32 %v1094, %v1097
    %vm1099 = vweird.f32 %v1093
    %vm1100 = vweird.f32 %v1094
    %vm1101 = vmor %vm1099, %vm1100
    %v1102 = vsel %vm1101, %v1094, %v1098
    %v1103 = vand.u32 2147483647, %v1093
    %vm1104 = vcmp.eq.f32.partialorder %v1103, 8.507059e+37
    %v1105 = vand.u32 %v1093, 2147483648
    %v1106 = vor.u32 1.1754944e-38, %v1105
    %v1107 = vsel %vm1104, %v1106, %v1102
    %v1108 = vmul.f32 1.0, %v1107
    %1110 = vrot.lane.b32.xlu0 %v1087, 64
    %v1111 = vpop.permute.xlu0 %1110
    %v1113 = vmul.f32 %v1108, %v1111
    %1115 = vrot.lane.b32.xlu0 %v1113, 64
    %v1116 = vpop.permute.xlu0 %1115
    %v1118 = vadd.f32 %v1067, %v1116
    %v1119 = vtanh.pop %v1118
    %v1120 = vsub.f32 1.0, %v1108
    %1122 = vrot.lane.b32.xlu0 %v1119, 96
    %v1123 = vpop.permute.xlu0 %1122
    %v1125 = vmul.f32 %v1120, %v1123
    %v1126 = vmul.f32 %v1108, %v976
    %v1127 = vadd.f32 %v1125, %v1126
    %1129 = vrot.lane.b32.xlu0 %v1127, 96
    %v1130 = vpop.permute.xlu0 %1129
    %v1131 = vsel %vm151, %v1130, 0
    %1133 = vmatpush.msra.mxu0 0.0
    %1134 = vmatpush.msra.mxu0 0.0
    %1135 = vmatpush.msra.mxu0 0.0
    %1136 = vmatpush.msra.mxu0 0.0
    %1137 = vmatpush.msra.mxu0 0.0
    %1138 = vmatpush.msra.mxu0 0.0
    %1139 = vmatpush.msra.mxu0 0.0
    %1140 = vmatpush.msra.mxu0 0.0
    %1141 = vmatpush.msra.mxu0 0.0
    %1142 = vmatpush.msra.mxu0 0.0
    %1143 = vmatpush.msra.mxu0 0.0
    %1144 = vmatpush.msra.mxu0 0.0
    %1145 = vmatpush.msra.mxu0 %v116
    %1146 = vmatpush.msra.mxu0 %v115
    %1147 = vmatpush.msra.mxu0 %v114
    %1148 = vmatpush.msra.mxu0 %v113
    %1149 = vmatmul.f32.gmra.mxu0 %v1131
    %v1150 = vpop.f32.mrf.mxu0
    %v1151 = vadd.f32 %v218, %v1150
    %1152 = vdwg.mxu0
    %v1153 = vsel %vm245, %v1151, -inf
    %1154 = vmax.xlane.f32.xlu0 %v1153
    %v1155 = vpop.xlane.xlu0 %1154
    %v1156 = vsub.f32 %v1151, %v1155
    %v1157 = vmul.f32 %v1156, 1.442695
    %v1158 = vpow.pop %v1157
    %v1159 = vsel %vm245, %v1158, 0.0
    %1160 = vadd.xlane.f32.xlu0 %v1159
    %v1161 = vpop.xlane.xlu0 %1160
    %v1162 = vlog2.pop %v1161
    %v1163 = vmul.f32 %v1162, 0.6931472
    %v1164 = vadd.f32 %v1155, %v1163
    %v1165 = vsub.f32 %v1151, %v1164
    %v1167 = vrot.slane %v1165, 1
    %v1168 = vrot.slane %v1165, 2
    %v1169 = vrot.slane %v1165, 3
    %1173 = vst.msk [vmem:[%s6 + $0x6] sm:$0x1] %vm266, %v1165
    %1174 = vst.msk [vmem:[%s6 + $0x16] sm:$0x1] %vm266, %v1167
    %1175 = vst.msk [vmem:[%s6 + $0x26] sm:$0x1] %vm266, %v1168
    %1176 = vst.msk [vmem:[%s6 + $0x36] sm:$0x1] %vm266, %v1169
    %vm1177 = vcmp.ge.f32.partialorder %v1151, %v1155
    %v1178 = vsel %vm1177, %v119, 64
    %v1179 = vsel %vm245, %v1178, 2147483647
    %v1180 = vand.u32 %v1179, 65535
    %v1181 = vshra.s32 %v1179, 16
    %v1182 = vcvt.s32.f32 %v1180
    %v1183 = vcvt.s32.f32 %v1181
    %1184 = vmin.xlane.f32.xlu0 %v1183
    %v1185 = vpop.xlane.xlu0 %1184
    %vm1186 = vcmp.eq.f32.partialorder %v1183, %v1185
    %v1187 = vsel %vm1186, %v1182, inf
    %1188 = vmin.xlane.f32.xlu0 %v1187
    %v1189 = vpop.xlane.xlu0 %1188
    %v1190 = vcvt.f32.s32 %v1189
    %v1191 = vcvt.f32.s32 %v1185
    %v1192 = vshll.u32 %v1191, 16
    %v1193 = vadd.s32 %v1192, %v1190
    %vm1194 = vcmp.eq.s32.totalorder %v119, %v1193
    %v1195 = vsel %vm1194, 1, 0
    %v1196 = vcvt.s32.f32 %v1195
    %v1198 = vsel %vm124, %v1196, 0
    %1200 = vmatpush.msra.mxu0 0.0
    %1201 = vmatpush.msra.mxu0 0.0
    %1202 = vmatpush.msra.mxu0 0.0
    %1203 = vmatpush.msra.mxu0 0.0
    %1204 = vmatpush.msra.mxu0 0.0
    %1205 = vmatpush.msra.mxu0 0.0
    %1206 = vmatpush.msra.mxu0 0.0
    %1207 = vmatpush.msra.mxu0 0.0
    %1208 = vmatpush.msra.mxu0 %v107
    %1209 = vmatpush.msra.mxu0 %v106
    %1210 = vmatpush.msra.mxu0 %v105
    %1211 = vmatpush.msra.mxu0 %v104
    %1212 = vmatpush.msra.mxu0 %v103
    %1213 = vmatpush.msra.mxu0 %v102
    %1214 = vmatpush.msra.mxu0 %v101
    %1215 = vmatpush.msra.mxu0 %v100
    %1216 = vmatmul.f32.gmra.mxu0 %v1198
    %v1217 = vpop.f32.mrf.mxu0
    %v1218 = vadd.f32 0.0, %v1217
    %1219 = vdwg.mxu0
    %1220 = vmatpush.msra.mxu0 0.0
    %1221 = vmatpush.msra.mxu0 0.0
    %1222 = vmatpush.msra.mxu0 0.0
    %1223 = vmatpush.msra.mxu0 0.0
    %1224 = vmatpush.msra.mxu0 0.0
    %1225 = vmatpush.msra.mxu0 0.0
    %1226 = vmatpush.msra.mxu0 0.0
    %1227 = vmatpush.msra.mxu0 0.0
    %1228 = vmatpush.msra.mxu0 0.0
    %1229 = vmatpush.msra.mxu0 0.0
    %1230 = vmatpush.msra.mxu0 0.0
    %1231 = vmatpush.msra.mxu0 0.0
    %1232 = vmatpush.msra.mxu0 %v111
    %1233 = vmatpush.msra.mxu0 %v110
    %1234 = vmatpush.msra.mxu0 %v109
    %1235 = vmatpush.msra.mxu0 %v108
    %1236 = vmatmul.f32.gmra.mxu0 %v1131
    %v1237 = vpop.f32.mrf.mxu0
    %v1238 = vadd.f32 %v149, %v1237
    %1239 = vdwg.mxu0
    %v1240 = vadd.f32 %v1218, %v1238
    %v1241 = vxor.u32 %v1240, 2147483648
    %v1242 = vmul.f32 %v1241, 1.442695
    %v1243 = vpow.pop %v1242
    %v1244 = vadd.f32 %v1243, 1.0
    %v1245 = vrcp.pop %v1244
    %v1246 = vmul.f32 %v1244, %v1245
    %v1247 = vsub.f32 1.0, %v1246
    %v1248 = vmul.f32 %v1245, %v1247
    %v1249 = vadd.f32 %v1245, %v1248
    %vm1250 = vweird.f32 %v1244
    %vm1251 = vweird.f32 %v1245
    %vm1252 = vmor %vm1250, %vm1251
    %v1253 = vsel %vm1252, %v1245, %v1249
    %v1254 = vand.u32 2147483647, %v1244
    %vm1255 = vcmp.eq.f32.partialorder %v1254, 8.507059e+37
    %v1256 = vand.u32 %v1244, 2147483648
    %v1257 = vor.u32 1.1754944e-38, %v1256
    %v1258 = vsel %vm1255, %v1257, %v1253
    %v1259 = vmul.f32 1.0, %v1258
    %1261 = vrot.lane.b32.xlu0 %v1238, 64
    %v1262 = vpop.permute.xlu0 %1261
    %v1264 = vmul.f32 %v1259, %v1262
    %1266 = vrot.lane.b32.xlu0 %v1264, 64
    %v1267 = vpop.permute.xlu0 %1266
    %v1269 = vadd.f32 %v1218, %v1267
    %v1270 = vtanh.pop %v1269
    %v1271 = vsub.f32 1.0, %v1259
    %1273 = vrot.lane.b32.xlu0 %v1270, 96
    %v1274 = vpop.permute.xlu0 %1273
    %v1276 = vmul.f32 %v1271, %v1274
    %v1277 = vmul.f32 %v1259, %v1127
    %v1278 = vadd.f32 %v1276, %v1277
    %1280 = vrot.lane.b32.xlu0 %v1278, 96
    %v1281 = vpop.permute.xlu0 %1280
    %v1282 = vsel %vm151, %v1281, 0
    %1284 = vmatpush.msra.mxu0 0.0
    %1285 = vmatpush.msra.mxu0 0.0
    %1286 = vmatpush.msra.mxu0 0.0
    %1287 = vmatpush.msra.mxu0 0.0
    %1288 = vmatpush.msra.mxu0 0.0
    %1289 = vmatpush.msra.mxu0 0.0
    %1290 = vmatpush.msra.mxu0 0.0
    %1291 = vmatpush.msra.mxu0 0.0
    %1292 = vmatpush.msra.mxu0 0.0
    %1293 = vmatpush.msra.mxu0 0.0
    %1294 = vmatpush.msra.mxu0 0.0
    %1295 = vmatpush.msra.mxu0 0.0
    %1296 = vmatpush.msra.mxu0 %v116
    %1297 = vmatpush.msra.mxu0 %v115
    %1298 = vmatpush.msra.mxu0 %v114
    %1299 = vmatpush.msra.mxu0 %v113
    %1300 = vmatmul.f32.gmra.mxu0 %v1282
    %v1301 = vpop.f32.mrf.mxu0
    %v1302 = vadd.f32 %v218, %v1301
    %1303 = vdwg.mxu0
    %v1304 = vsel %vm245, %v1302, -inf
    %1305 = vmax.xlane.f32.xlu0 %v1304
    %v1306 = vpop.xlane.xlu0 %1305
    %v1307 = vsub.f32 %v1302, %v1306
    %v1308 = vmul.f32 %v1307, 1.442695
    %v1309 = vpow.pop %v1308
    %v1310 = vsel %vm245, %v1309, 0.0
    %1311 = vadd.xlane.f32.xlu0 %v1310
    %v1312 = vpop.xlane.xlu0 %1311
    %v1313 = vlog2.pop %v1312
    %v1314 = vmul.f32 %v1313, 0.6931472
    %v1315 = vadd.f32 %v1306, %v1314
    %v1316 = vsub.f32 %v1302, %v1315
    %v1318 = vrot.slane %v1316, 1
    %v1319 = vrot.slane %v1316, 2
    %v1320 = vrot.slane %v1316, 3
    %1324 = vst.msk [vmem:[%s6 + $0x7] sm:$0x1] %vm266, %v1316
    %1325 = vst.msk [vmem:[%s6 + $0x17] sm:$0x1] %vm266, %v1318
    %1326 = vst.msk [vmem:[%s6 + $0x27] sm:$0x1] %vm266, %v1319
    %1327 = vst.msk [vmem:[%s6 + $0x37] sm:$0x1] %vm266, %v1320
    %vm1328 = vcmp.ge.f32.partialorder %v1302, %v1306
    %v1329 = vsel %vm1328, %v119, 64
    %v1330 = vsel %vm245, %v1329, 2147483647
    %v1331 = vand.u32 %v1330, 65535
    %v1332 = vshra.s32 %v1330, 16
    %v1333 = vcvt.s32.f32 %v1331
    %v1334 = vcvt.s32.f32 %v1332
    %1335 = vmin.xlane.f32.xlu0 %v1334
    %v1336 = vpop.xlane.xlu0 %1335
    %vm1337 = vcmp.eq.f32.partialorder %v1334, %v1336
    %v1338 = vsel %vm1337, %v1333, inf
    %1339 = vmin.xlane.f32.xlu0 %v1338
    %v1340 = vpop.xlane.xlu0 %1339
    %v1341 = vcvt.f32.s32 %v1340
    %v1342 = vcvt.f32.s32 %v1336
    %v1343 = vshll.u32 %v1342, 16
    %v1344 = vadd.s32 %v1343, %v1341
    %vm1345 = vcmp.eq.s32.totalorder %v119, %v1344
    %v1346 = vsel %vm1345, 1, 0
    %v1347 = vcvt.s32.f32 %v1346
    %v1349 = vsel %vm124, %v1347, 0
    %1351 = vmatpush.msra.mxu0 0.0
    %1352 = vmatpush.msra.mxu0 0.0
    %1353 = vmatpush.msra.mxu0 0.0
    %1354 = vmatpush.msra.mxu0 0.0
    %1355 = vmatpush.msra.mxu0 0.0
    %1356 = vmatpush.msra.mxu0 0.0
    %1357 = vmatpush.msra.mxu0 0.0
    %1358 = vmatpush.msra.mxu0 0.0
    %1359 = vmatpush.msra.mxu0 %v107
    %1360 = vmatpush.msra.mxu0 %v106
    %1361 = vmatpush.msra.mxu0 %v105
    %1362 = vmatpush.msra.mxu0 %v104
    %1363 = vmatpush.msra.mxu0 %v103
    %1364 = vmatpush.msra.mxu0 %v102
    %1365 = vmatpush.msra.mxu0 %v101
    %1366 = vmatpush.msra.mxu0 %v100
    %1367 = vmatmul.f32.gmra.mxu0 %v1349
    %v1368 = vpop.f32.mrf.mxu0
    %v1369 = vadd.f32 0.0, %v1368
    %1370 = vdwg.mxu0
    %1371 = vmatpush.msra.mxu0 0.0
    %1372 = vmatpush.msra.mxu0 0.0
    %1373 = vmatpush.msra.mxu0 0.0
    %1374 = vmatpush.msra.mxu0 0.0
    %1375 = vmatpush.msra.mxu0 0.0
    %1376 = vmatpush.msra.mxu0 0.0
    %1377 = vmatpush.msra.mxu0 0.0
    %1378 = vmatpush.msra.mxu0 0.0
    %1379 = vmatpush.msra.mxu0 0.0
    %1380 = vmatpush.msra.mxu0 0.0
    %1381 = vmatpush.msra.mxu0 0.0
    %1382 = vmatpush.msra.mxu0 0.0
    %1383 = vmatpush.msra.mxu0 %v111
    %1384 = vmatpush.msra.mxu0 %v110
    %1385 = vmatpush.msra.mxu0 %v109
    %1386 = vmatpush.msra.mxu0 %v108
    %1387 = vmatmul.f32.gmra.mxu0 %v1282
    %v1388 = vpop.f32.mrf.mxu0
    %v1389 = vadd.f32 %v149, %v1388
    %1390 = vdwg.mxu0
    %v1391 = vadd.f32 %v1369, %v1389
    %v1392 = vxor.u32 %v1391, 2147483648
    %v1393 = vmul.f32 %v1392, 1.442695
    %v1394 = vpow.pop %v1393
    %v1395 = vadd.f32 %v1394, 1.0
    %v1396 = vrcp.pop %v1395
    %v1397 = vmul.f32 %v1395, %v1396
    %v1398 = vsub.f32 1.0, %v1397
    %v1399 = vmul.f32 %v1396, %v1398
    %v1400 = vadd.f32 %v1396, %v1399
    %vm1401 = vweird.f32 %v1395
    %vm1402 = vweird.f32 %v1396
    %vm1403 = vmor %vm1401, %vm1402
    %v1404 = vsel %vm1403, %v1396, %v1400
    %v1405 = vand.u32 2147483647, %v1395
    %vm1406 = vcmp.eq.f32.partialorder %v1405, 8.507059e+37
    %v1407 = vand.u32 %v1395, 2147483648
    %v1408 = vor.u32 1.1754944e-38, %v1407
    %v1409 = vsel %vm1406, %v1408, %v1404
    %v1410 = vmul.f32 1.0, %v1409
    %1412 = vrot.lane.b32.xlu0 %v1389, 64
    %v1413 = vpop.permute.xlu0 %1412
    %v1415 = vmul.f32 %v1410, %v1413
    %1417 = vrot.lane.b32.xlu0 %v1415, 64
    %v1418 = vpop.permute.xlu0 %1417
    %v1420 = vadd.f32 %v1369, %v1418
    %v1421 = vtanh.pop %v1420
    %v1422 = vsub.f32 1.0, %v1410
    %1424 = vrot.lane.b32.xlu0 %v1421, 96
    %v1425 = vpop.permute.xlu0 %1424
    %v1427 = vmul.f32 %v1422, %v1425
    %v1428 = vmul.f32 %v1410, %v1278
    %v1429 = vadd.f32 %v1427, %v1428
    %1431 = vrot.lane.b32.xlu0 %v1429, 96
    %v1432 = vpop.permute.xlu0 %1431
    %v1433 = vsel %vm151, %v1432, 0
    %1435 = vmatpush.msra.mxu0 0.0
    %1436 = vmatpush.msra.mxu0 0.0
    %1437 = vmatpush.msra.mxu0 0.0
    %1438 = vmatpush.msra.mxu0 0.0
    %1439 = vmatpush.msra.mxu0 0.0
    %1440 = vmatpush.msra.mxu0 0.0
    %1441 = vmatpush.msra.mxu0 0.0
    %1442 = vmatpush.msra.mxu0 0.0
    %1443 = vmatpush.msra.mxu0 0.0
    %1444 = vmatpush.msra.mxu0 0.0
    %1445 = vmatpush.msra.mxu0 0.0
    %1446 = vmatpush.msra.mxu0 0.0
    %1447 = vmatpush.msra.mxu0 %v116
    %1448 = vmatpush.msra.mxu0 %v115
    %1449 = vmatpush.msra.mxu0 %v114
    %1450 = vmatpush.msra.mxu0 %v113
    %1451 = vmatmul.f32.gmra.mxu0 %v1433
    %v1452 = vpop.f32.mrf.mxu0
    %v1453 = vadd.f32 %v218, %v1452
    %1454 = vdwg.mxu0
    %v1455 = vsel %vm245, %v1453, -inf
    %1456 = vmax.xlane.f32.xlu0 %v1455
    %v1457 = vpop.xlane.xlu0 %1456
    %v1458 = vsub.f32 %v1453, %v1457
    %v1459 = vmul.f32 %v1458, 1.442695
    %v1460 = vpow.pop %v1459
    %v1461 = vsel %vm245, %v1460, 0.0
    %1462 = vadd.xlane.f32.xlu0 %v1461
    %v1463 = vpop.xlane.xlu0 %1462
    %v1464 = vlog2.pop %v1463
    %v1465 = vmul.f32 %v1464, 0.6931472
    %v1466 = vadd.f32 %v1457, %v1465
    %v1467 = vsub.f32 %v1453, %v1466
    %v1469 = vrot.slane %v1467, 1
    %v1470 = vrot.slane %v1467, 2
    %v1471 = vrot.slane %v1467, 3
    %1475 = vst.msk [vmem:[%s6 + $0x8] sm:$0x1] %vm266, %v1467
    %1476 = vst.msk [vmem:[%s6 + $0x18] sm:$0x1] %vm266, %v1469
    %1477 = vst.msk [vmem:[%s6 + $0x28] sm:$0x1] %vm266, %v1470
    %1478 = vst.msk [vmem:[%s6 + $0x38] sm:$0x1] %vm266, %v1471
    %vm1479 = vcmp.ge.f32.partialorder %v1453, %v1457
    %v1480 = vsel %vm1479, %v119, 64
    %v1481 = vsel %vm245, %v1480, 2147483647
    %v1482 = vand.u32 %v1481, 65535
    %v1483 = vshra.s32 %v1481, 16
    %v1484 = vcvt.s32.f32 %v1482
    %v1485 = vcvt.s32.f32 %v1483
    %1486 = vmin.xlane.f32.xlu0 %v1485
    %v1487 = vpop.xlane.xlu0 %1486
    %vm1488 = vcmp.eq.f32.partialorder %v1485, %v1487
    %v1489 = vsel %vm1488, %v1484, inf
    %1490 = vmin.xlane.f32.xlu0 %v1489
    %v1491 = vpop.xlane.xlu0 %1490
    %v1492 = vcvt.f32.s32 %v1491
    %v1493 = vcvt.f32.s32 %v1487
    %v1494 = vshll.u32 %v1493, 16
    %v1495 = vadd.s32 %v1494, %v1492
    %vm1496 = vcmp.eq.s32.totalorder %v119, %v1495
    %v1497 = vsel %vm1496, 1, 0
    %v1498 = vcvt.s32.f32 %v1497
    %v1500 = vsel %vm124, %v1498, 0
    %1502 = vmatpush.msra.mxu0 0.0
    %1503 = vmatpush.msra.mxu0 0.0
    %1504 = vmatpush.msra.mxu0 0.0
    %1505 = vmatpush.msra.mxu0 0.0
    %1506 = vmatpush.msra.mxu0 0.0
    %1507 = vmatpush.msra.mxu0 0.0
    %1508 = vmatpush.msra.mxu0 0.0
    %1509 = vmatpush.msra.mxu0 0.0
    %1510 = vmatpush.msra.mxu0 %v107
    %1511 = vmatpush.msra.mxu0 %v106
    %1512 = vmatpush.msra.mxu0 %v105
    %1513 = vmatpush.msra.mxu0 %v104
    %1514 = vmatpush.msra.mxu0 %v103
    %1515 = vmatpush.msra.mxu0 %v102
    %1516 = vmatpush.msra.mxu0 %v101
    %1517 = vmatpush.msra.mxu0 %v100
    %1518 = vmatmul.f32.gmra.mxu0 %v1500
    %v1519 = vpop.f32.mrf.mxu0
    %v1520 = vadd.f32 0.0, %v1519
    %1521 = vdwg.mxu0
    %1522 = vmatpush.msra.mxu0 0.0
    %1523 = vmatpush.msra.mxu0 0.0
    %1524 = vmatpush.msra.mxu0 0.0
    %1525 = vmatpush.msra.mxu0 0.0
    %1526 = vmatpush.msra.mxu0 0.0
    %1527 = vmatpush.msra.mxu0 0.0
    %1528 = vmatpush.msra.mxu0 0.0
    %1529 = vmatpush.msra.mxu0 0.0
    %1530 = vmatpush.msra.mxu0 0.0
    %1531 = vmatpush.msra.mxu0 0.0
    %1532 = vmatpush.msra.mxu0 0.0
    %1533 = vmatpush.msra.mxu0 0.0
    %1534 = vmatpush.msra.mxu0 %v111
    %1535 = vmatpush.msra.mxu0 %v110
    %1536 = vmatpush.msra.mxu0 %v109
    %1537 = vmatpush.msra.mxu0 %v108
    %1538 = vmatmul.f32.gmra.mxu0 %v1433
    %v1539 = vpop.f32.mrf.mxu0
    %v1540 = vadd.f32 %v149, %v1539
    %1541 = vdwg.mxu0
    %v1542 = vadd.f32 %v1520, %v1540
    %v1543 = vxor.u32 %v1542, 2147483648
    %v1544 = vmul.f32 %v1543, 1.442695
    %v1545 = vpow.pop %v1544
    %v1546 = vadd.f32 %v1545, 1.0
    %v1547 = vrcp.pop %v1546
    %v1548 = vmul.f32 %v1546, %v1547
    %v1549 = vsub.f32 1.0, %v1548
    %v1550 = vmul.f32 %v1547, %v1549
    %v1551 = vadd.f32 %v1547, %v1550
    %vm1552 = vweird.f32 %v1546
    %vm1553 = vweird.f32 %v1547
    %vm1554 = vmor %vm1552, %vm1553
    %v1555 = vsel %vm1554, %v1547, %v1551
    %v1556 = vand.u32 2147483647, %v1546
    %vm1557 = vcmp.eq.f32.partialorder %v1556, 8.507059e+37
    %v1558 = vand.u32 %v1546, 2147483648
    %v1559 = vor.u32 1.1754944e-38, %v1558
    %v1560 = vsel %vm1557, %v1559, %v1555
    %v1561 = vmul.f32 1.0, %v1560
    %1563 = vrot.lane.b32.xlu0 %v1540, 64
    %v1564 = vpop.permute.xlu0 %1563
    %v1566 = vmul.f32 %v1561, %v1564
    %1568 = vrot.lane.b32.xlu0 %v1566, 64
    %v1569 = vpop.permute.xlu0 %1568
    %v1571 = vadd.f32 %v1520, %v1569
    %v1572 = vtanh.pop %v1571
    %v1573 = vsub.f32 1.0, %v1561
    %1575 = vrot.lane.b32.xlu0 %v1572, 96
    %v1576 = vpop.permute.xlu0 %1575
    %v1578 = vmul.f32 %v1573, %v1576
    %v1579 = vmul.f32 %v1561, %v1429
    %v1580 = vadd.f32 %v1578, %v1579
    %1582 = vrot.lane.b32.xlu0 %v1580, 96
    %v1583 = vpop.permute.xlu0 %1582
    %v1584 = vsel %vm151, %v1583, 0
    %1586 = vmatpush.msra.mxu0 0.0
    %1587 = vmatpush.msra.mxu0 0.0
    %1588 = vmatpush.msra.mxu0 0.0
    %1589 = vmatpush.msra.mxu0 0.0
    %1590 = vmatpush.msra.mxu0 0.0
    %1591 = vmatpush.msra.mxu0 0.0
    %1592 = vmatpush.msra.mxu0 0.0
    %1593 = vmatpush.msra.mxu0 0.0
    %1594 = vmatpush.msra.mxu0 0.0
    %1595 = vmatpush.msra.mxu0 0.0
    %1596 = vmatpush.msra.mxu0 0.0
    %1597 = vmatpush.msra.mxu0 0.0
    %1598 = vmatpush.msra.mxu0 %v116
    %1599 = vmatpush.msra.mxu0 %v115
    %1600 = vmatpush.msra.mxu0 %v114
    %1601 = vmatpush.msra.mxu0 %v113
    %1602 = vmatmul.f32.gmra.mxu0 %v1584
    %v1603 = vpop.f32.mrf.mxu0
    %v1604 = vadd.f32 %v218, %v1603
    %1605 = vdwg.mxu0
    %v1606 = vsel %vm245, %v1604, -inf
    %1607 = vmax.xlane.f32.xlu0 %v1606
    %v1608 = vpop.xlane.xlu0 %1607
    %v1609 = vsub.f32 %v1604, %v1608
    %v1610 = vmul.f32 %v1609, 1.442695
    %v1611 = vpow.pop %v1610
    %v1612 = vsel %vm245, %v1611, 0.0
    %1613 = vadd.xlane.f32.xlu0 %v1612
    %v1614 = vpop.xlane.xlu0 %1613
    %v1615 = vlog2.pop %v1614
    %v1616 = vmul.f32 %v1615, 0.6931472
    %v1617 = vadd.f32 %v1608, %v1616
    %v1618 = vsub.f32 %v1604, %v1617
    %v1620 = vrot.slane %v1618, 1
    %v1621 = vrot.slane %v1618, 2
    %v1622 = vrot.slane %v1618, 3
    %1626 = vst.msk [vmem:[%s6 + $0x9] sm:$0x1] %vm266, %v1618
    %1627 = vst.msk [vmem:[%s6 + $0x19] sm:$0x1] %vm266, %v1620
    %1628 = vst.msk [vmem:[%s6 + $0x29] sm:$0x1] %vm266, %v1621
    %1629 = vst.msk [vmem:[%s6 + $0x39] sm:$0x1] %vm266, %v1622
    %vm1631 = vcmask 257024
    %1632 = vst.msk [vmem:[#allocation11] sm:$0xf] %vm1631, %v1583
    // Predicated region
    $region46: #{tpu_custom_call.1} parent=1 // pred_check
      _
    $region47: #{tpu_custom_call.1} parent=1 // pred_check_branch
      %1634 = sbr.rel (0) target = $region49
    $region48: #{tpu_custom_call.1} parent=1 // pred_region
      _
    $region49: #{tpu_custom_call.1} parent=1 // pred_fallthru
      _
    // Predicated region
    $region50: #{tpu_custom_call.1} parent=1 // pred_check
      _
    $region51: #{tpu_custom_call.1} parent=1 // pred_check_branch
      %1636 = sbr.rel (0) target = $region53
    $region52: #{tpu_custom_call.1} parent=1 // pred_region
      %1638 = vsyncadd [#allocation4], 0
      %s1640 = sshll.u32 [#allocation11], 4
      %s1641 = int_to_ptr.vmem [resolvable:$true] %s1640
      %s1642 = sshll.u32 %s7, 4
      %s1643 = int_to_ptr.hbm [resolvable:$true] %s1642
      %1645 = dma.vmem_to_hbm [thread:$0]  %s1641, 64, %s1643, [#allocation4]
    $region53: #{tpu_custom_call.1} parent=1 // pred_fallthru
      _
    // Predicated region
    $region54: #{tpu_custom_call.1} parent=1 // pred_check
      _
    $region55: #{tpu_custom_call.1} parent=1 // pred_check_branch
      %1647 = sbr.rel (0) target = $region57
    $region56: #{tpu_custom_call.1} parent=1 // pred_region
      _
    $region57: #{tpu_custom_call.1} parent=1 // pred_fallthru
      _
    // Predicated region
    $region58: #{tpu_custom_call.1} parent=1 // pred_check
      _
    $region59: #{tpu_custom_call.1} parent=1 // pred_check_branch
      %1649 = sbr.rel (0) target = $region61
    $region60: #{tpu_custom_call.1} parent=1 // pred_region
      %1651 = dma.done [#allocation4], 64
    $region61: #{tpu_custom_call.1} parent=1 // pred_fallthru
      _
    %1652 = vsyncpa [#allocation3], 1
    %1653 = vsyncpa [#allocation6], 1
    %1654 = vsyncpa [#allocation9], 1
    %1655 = vsyncpa [#allocation4], 1

</llo_original>
